<compile_context>
chip_gen: v6e
topology: v6e:2x2x1
jax: 0.10.0
libtpu: 0.0.40
codegen_flags: <defaults>
</compile_context>

<pallas_src>
import functools

import jax
import jax.numpy as jnp
from jax.experimental import pallas as pl
from jax.experimental.pallas import tpu as pltpu


def dwconv_kernel(x_ref, w_ref, b_ref, o_ref, xpad_ref, *, H, W, C, Cg, L):
    # x_ref:    (1, H, W*C)            one image, interior only (no padding)
    # w_ref:    (9*(2Cg-1), W*C)       group-masked weight vector per (tap, channel shift)
    # b_ref:    (1, W*C)               bias tiled over W
    # o_ref:    (1, H, W*C)            output tile
    # xpad_ref: (H+2, PADW) f32 VMEM   zero-margined working buffer (interior at [1:H+1, L:L+WC])
    WC = W * C

    # Zero the scratch every step (cheap) instead of a program_id==0 init: safe under
    # megacore grid sharding where a core may never execute step 0.
    xpad_ref[...] = jnp.zeros_like(xpad_ref)
    xpad_ref[1:H + 1, L:L + WC] = x_ref[0].astype(xpad_ref.dtype)

    # Accumulator initialized from the broadcast bias (saves a separate full-tile add).
    acc = jnp.broadcast_to(b_ref[...], (H, WC)).astype(jnp.float32)

    # 3x3 taps x (2*Cg-1) within-group channel shifts, statically unrolled.
    # Each term is a contiguous 2-D window of the padded scratch; spatial zero padding
    # and cross-group leakage both land either in the zero margins or on weight lanes
    # that were zeroed in w_ref, so no runtime masking is needed.
    idx = 0
    for kh in range(3):
        for kw in range(3):
            base = L + (kw - 1) * C
            for s in range(-(Cg - 1), Cg):
                xs = xpad_ref[kh:kh + H, base + s:base + s + WC]   # (H, WC)
                wv = w_ref[idx:idx + 1, :]                         # (1, WC)
                acc = acc + xs * wv
                idx += 1

    o_ref[0, ...] = acc.astype(o_ref.dtype)


def build_weight_vectors(weight, bias, W):
    """weight: (C, Cg, 3, 3) torch-style grouped OIHW; bias: (C,).

    Returns
      w_vec: (9*(2Cg-1), W*C)  weight vectors per (tap, within-group channel shift),
                               already masked for group validity and tiled over W.
      b_vec: (1, W*C)          bias tiled over W.

    For output lane co, the shift-s term multiplies the input at channel co+s, so
    w_vec[t*(2Cg-1)+si][w*C+co] = weight[co, co%Cg + s, kh, kw] if 0 <= co%Cg+s < Cg else 0.
    """
    C, Cg, KH, KW = weight.shape
    S = 2 * Cg - 1
    shifts = jnp.arange(-(Cg - 1), Cg)                       # (S,)
    co = jnp.arange(C)                                       # (C,)
    ci_local = (co % Cg)[None, :] + shifts[:, None]          # (S, C)
    valid = (ci_local >= 0) & (ci_local < Cg)
    ci_cl = jnp.clip(ci_local, 0, Cg - 1)

    # (C, Cg, KH, KW) -> (9, C, Cg); single vectorized gather, no .at[].set loops.
    w_kk = jnp.transpose(weight, (2, 3, 0, 1)).reshape(KH * KW, C, Cg)
    co_idx = jnp.broadcast_to(co[None, :], (S, C))
    gathered = w_kk[:, co_idx, ci_cl]                         # (9, S, C)
    gathered = jnp.where(valid[None, :, :], gathered, jnp.zeros((), weight.dtype))

    w_vec = jnp.tile(gathered, (1, 1, W)).reshape(KH * KW * S, W * C)
    b_vec = jnp.tile(bias, W).reshape(1, W * C)
    return w_vec, b_vec


@functools.partial(jax.jit, static_argnames=("H", "W", "groups"))
def dwconv_forward(x, weight, bias, H, W, groups=16):
    """x: (B, N, C) with N == H*W (row-major n = h*W + w).  Returns (B, N, C)."""
    B, N, C = x.shape
    assert N == H * W
    assert C % groups == 0
    Cg = C // groups
    S = 2 * Cg - 1
    WC = W * C

    # Lane-aligned left margin covering the most-negative read offset (C + Cg - 1 lanes);
    # right margin covers the most-positive one.  Padded row width stays small (O(W*C)).
    L = ((C + Cg + 127) // 128) * 128
    PADW = L + WC + (C + Cg)

    # (B, N, C) -> (B, H, W*C) is a pure reshape: no transpose, no jnp.pad, no extra HBM copy.
    x_wide = x.reshape(B, H, WC)
    w_vec, b_vec = build_weight_vectors(weight, bias, W)

    kernel = functools.partial(dwconv_kernel, H=H, W=W, C=C, Cg=Cg, L=L)
    out_wide = pl.pallas_call(
        kernel,
        out_shape=jax.ShapeDtypeStruct((B, H, WC), x.dtype),
        grid_spec=pltpu.PrefetchScalarGridSpec(
            num_scalar_prefetch=0,
            grid=(B,),
            in_specs=[
                pl.BlockSpec((1, H, WC), lambda b: (b, 0, 0)),      # x (lane-dense)
                pl.BlockSpec((9 * S, WC), lambda b: (0, 0)),        # weight vectors
                pl.BlockSpec((1, WC), lambda b: (0, 0)),            # bias
            ],
            out_specs=pl.BlockSpec((1, H, WC), lambda b: (b, 0, 0)),
            scratch_shapes=[pltpu.VMEM((H + 2, PADW), jnp.float32)],
        ),
        compiler_params=pltpu.CompilerParams(
            dimension_semantics=("parallel",)),
    )(x_wide, w_vec, b_vec)

    return out_wide.reshape(B, N, C)


def dwconv_reference(x, weight, bias, H, W, groups=16):
    """Pure-JAX reference matching torch semantics exactly."""
    B, N, C = x.shape
    x_nchw = jnp.transpose(x, (0, 2, 1)).reshape(B, C, H, W)
    y = jax.lax.conv_general_dilated(
        x_nchw, weight,
        window_strides=(1, 1), padding=((1, 1), (1, 1)),
        dimension_numbers=("NCHW", "OIHW", "NCHW"),
        feature_group_count=groups)
    y = y + bias[None, :, None, None]
    return jnp.transpose(y.reshape(B, C, H * W), (0, 2, 1))


if __name__ == "__main__":
    def run_case(key, B, H, W, C, groups):
        Cg = C // groups
        kx, kw, kb = jax.random.split(key, 3)
        x = jax.random.normal(kx, (B, H * W, C), dtype=jnp.float32)
        fan_in = Cg * 3 * 3
        weight = jax.random.normal(kw, (C, Cg, 3, 3), dtype=jnp.float32) / jnp.sqrt(fan_in)
        bias = jax.random.normal(kb, (C,), dtype=jnp.float32) * 0.01

        out = jax.block_until_ready(dwconv_forward(x, weight, bias, H, W, groups))
        ref = dwconv_reference(x, weight, bias, H, W, groups)
        assert out.shape == (B, H * W, C)
        assert jnp.allclose(out, ref, atol=1e-4, rtol=1e-4), \
            f"mismatch vs reference (C={C}, groups={groups})"

    key = jax.random.PRNGKey(0)
    k1, k2 = jax.random.split(key)
    # Small shapes consistent with the module (dim divisible by groups=16).
    run_case(k1, B=2, H=8, W=8, C=32, groups=16)   # Cg=2 : pair-wise VPU case
    run_case(k2, B=2, H=8, W=8, C=64, groups=16)   # Cg=4 : multi-shift path

    print("KERNEL_OK")
</pallas_src>

<mosaic_0001>
module attributes {stable_mosaic.version = 11 : i64} {
  func.func @dwconv_kernel(%arg0: i32, %arg1: memref<1x8x256xf32, #tpu.memory_space<vmem>>, %arg2: memref<27x256xf32, #tpu.memory_space<vmem>>, %arg3: memref<1x256xf32, #tpu.memory_space<vmem>>, %arg4: memref<1x8x256xf32, #tpu.memory_space<vmem>>, %arg5: memref<10x418xf32, #tpu.memory_space<vmem>>) attributes {dimension_semantics = [#tpu.dimension_semantics<parallel>], iteration_bounds = array<i64: 2>, scalar_prefetch = 0 : i64, scratch_operands = 1 : i64, tpu.core_type = #tpu.core_type<tc>, window_params = [{transform_indices = @transform_0, window_bounds = array<i64: 1, 8, 256>}, {pipeline_mode = #tpu.pipeline_mode<synchronous>, transform_indices = @transform_1, window_bounds = array<i64: 27, 256>}, {pipeline_mode = #tpu.pipeline_mode<synchronous>, transform_indices = @transform_2, window_bounds = array<i64: 1, 256>}, {transform_indices = @transform_3, window_bounds = array<i64: 1, 8, 256>}]} {
    %cst = arith.constant 0.000000e+00 : f32
    %0 = vector.broadcast %cst : f32 to vector<10x418xf32>
    %c0 = arith.constant 0 : index
    %c0_0 = arith.constant 0 : index
    %1 = vector.load %arg5[%c0, %c0_0] : memref<10x418xf32, #tpu.memory_space<vmem>>, vector<10x418xf32>
    tpu.vector_store %arg5[%c0, %c0_0], %0 {strides = array<i32>} : memref<10x418xf32, #tpu.memory_space<vmem>>, vector<10x418xf32>,
    %c0_1 = arith.constant 0 : index
    %c0_2 = arith.constant 0 : index
    %c0_3 = arith.constant 0 : index
    %2 = vector.load %arg1[%c0_1, %c0_2, %c0_3] : memref<1x8x256xf32, #tpu.memory_space<vmem>>, vector<1x8x256xf32>
    %3 = vector.shape_cast %2 : vector<1x8x256xf32> to vector<8x256xf32>
    %c1 = arith.constant 1 : index
    %c128 = arith.constant 128 : index
    %4 = vector.load %arg5[%c1, %c128] : memref<10x418xf32, #tpu.memory_space<vmem>>, vector<8x256xf32>
    tpu.vector_store %arg5[%c1, %c128], %3 {strides = array<i32>} : memref<10x418xf32, #tpu.memory_space<vmem>>, vector<8x256xf32>,
    %c0_4 = arith.constant 0 : index
    %c0_5 = arith.constant 0 : index
    %5 = vector.load %arg3[%c0_4, %c0_5] : memref<1x256xf32, #tpu.memory_space<vmem>>, vector<1x256xf32>
    %6 = vector.shape_cast %5 : vector<1x256xf32> to vector<1x256xf32>
    %7 = vector.broadcast %6 : vector<1x256xf32> to vector<8x256xf32>
    %c0_6 = arith.constant 0 : index
    %c95 = arith.constant 95 : index
    %8 = vector.load %arg5[%c0_6, %c95] : memref<10x418xf32, #tpu.memory_space<vmem>>, vector<8x256xf32>
    %c0_7 = arith.constant 0 : index
    %c0_8 = arith.constant 0 : index
    %9 = vector.load %arg2[%c0_7, %c0_8] : memref<27x256xf32, #tpu.memory_space<vmem>>, vector<1x256xf32>
    %10 = vector.broadcast %9 : vector<1x256xf32> to vector<8x256xf32>
    %11 = arith.mulf %8, %10 : vector<8x256xf32>
    %12 = arith.addf %7, %11 : vector<8x256xf32>
    %c0_9 = arith.constant 0 : index
    %c96 = arith.constant 96 : index
    %13 = vector.load %arg5[%c0_9, %c96] : memref<10x418xf32, #tpu.memory_space<vmem>>, vector<8x256xf32>
    %c1_10 = arith.constant 1 : index
    %c0_11 = arith.constant 0 : index
    %14 = vector.load %arg2[%c1_10, %c0_11] : memref<27x256xf32, #tpu.memory_space<vmem>>, vector<1x256xf32>
    %15 = vector.broadcast %14 : vector<1x256xf32> to vector<8x256xf32>
    %16 = arith.mulf %13, %15 : vector<8x256xf32>
    %17 = arith.addf %12, %16 : vector<8x256xf32>
    %c0_12 = arith.constant 0 : index
    %c97 = arith.constant 97 : index
    %18 = vector.load %arg5[%c0_12, %c97] : memref<10x418xf32, #tpu.memory_space<vmem>>, vector<8x256xf32>
    %c2 = arith.constant 2 : index
    %c0_13 = arith.constant 0 : index
    %19 = vector.load %arg2[%c2, %c0_13] : memref<27x256xf32, #tpu.memory_space<vmem>>, vector<1x256xf32>
    %20 = vector.broadcast %19 : vector<1x256xf32> to vector<8x256xf32>
    %21 = arith.mulf %18, %20 : vector<8x256xf32>
    %22 = arith.addf %17, %21 : vector<8x256xf32>
    %c0_14 = arith.constant 0 : index
    %c127 = arith.constant 127 : index
    %23 = vector.load %arg5[%c0_14, %c127] : memref<10x418xf32, #tpu.memory_space<vmem>>, vector<8x256xf32>
    %c3 = arith.constant 3 : index
    %c0_15 = arith.constant 0 : index
    %24 = vector.load %arg2[%c3, %c0_15] : memref<27x256xf32, #tpu.memory_space<vmem>>, vector<1x256xf32>
    %25 = vector.broadcast %24 : vector<1x256xf32> to vector<8x256xf32>
    %26 = arith.mulf %23, %25 : vector<8x256xf32>
    %27 = arith.addf %22, %26 : vector<8x256xf32>
    %c0_16 = arith.constant 0 : index
    %c128_17 = arith.constant 128 : index
    %28 = vector.load %arg5[%c0_16, %c128_17] : memref<10x418xf32, #tpu.memory_space<vmem>>, vector<8x256xf32>
    %c4 = arith.constant 4 : index
    %c0_18 = arith.constant 0 : index
    %29 = vector.load %arg2[%c4, %c0_18] : memref<27x256xf32, #tpu.memory_space<vmem>>, vector<1x256xf32>
    %30 = vector.broadcast %29 : vector<1x256xf32> to vector<8x256xf32>
    %31 = arith.mulf %28, %30 : vector<8x256xf32>
    %32 = arith.addf %27, %31 : vector<8x256xf32>
    %c0_19 = arith.constant 0 : index
    %c129 = arith.constant 129 : index
    %33 = vector.load %arg5[%c0_19, %c129] : memref<10x418xf32, #tpu.memory_space<vmem>>, vector<8x256xf32>
    %c5 = arith.constant 5 : index
    %c0_20 = arith.constant 0 : index
    %34 = vector.load %arg2[%c5, %c0_20] : memref<27x256xf32, #tpu.memory_space<vmem>>, vector<1x256xf32>
    %35 = vector.broadcast %34 : vector<1x256xf32> to vector<8x256xf32>
    %36 = arith.mulf %33, %35 : vector<8x256xf32>
    %37 = arith.addf %32, %36 : vector<8x256xf32>
    %c0_21 = arith.constant 0 : index
    %c159 = arith.constant 159 : index
    %38 = vector.load %arg5[%c0_21, %c159] : memref<10x418xf32, #tpu.memory_space<vmem>>, vector<8x256xf32>
    %c6 = arith.constant 6 : index
    %c0_22 = arith.constant 0 : index
    %39 = vector.load %arg2[%c6, %c0_22] : memref<27x256xf32, #tpu.memory_space<vmem>>, vector<1x256xf32>
    %40 = vector.broadcast %39 : vector<1x256xf32> to vector<8x256xf32>
    %41 = arith.mulf %38, %40 : vector<8x256xf32>
    %42 = arith.addf %37, %41 : vector<8x256xf32>
    %c0_23 = arith.constant 0 : index
    %c160 = arith.constant 160 : index
    %43 = vector.load %arg5[%c0_23, %c160] : memref<10x418xf32, #tpu.memory_space<vmem>>, vector<8x256xf32>
    %c7 = arith.constant 7 : index
    %c0_24 = arith.constant 0 : index
    %44 = vector.load %arg2[%c7, %c0_24] : memref<27x256xf32, #tpu.memory_space<vmem>>, vector<1x256xf32>
    %45 = vector.broadcast %44 : vector<1x256xf32> to vector<8x256xf32>
    %46 = arith.mulf %43, %45 : vector<8x256xf32>
    %47 = arith.addf %42, %46 : vector<8x256xf32>
    %c0_25 = arith.constant 0 : index
    %c161 = arith.constant 161 : index
    %48 = vector.load %arg5[%c0_25, %c161] : memref<10x418xf32, #tpu.memory_space<vmem>>, vector<8x256xf32>
    %c8 = arith.constant 8 : index
    %c0_26 = arith.constant 0 : index
    %49 = vector.load %arg2[%c8, %c0_26] : memref<27x256xf32, #tpu.memory_space<vmem>>, vector<1x256xf32>
    %50 = vector.broadcast %49 : vector<1x256xf32> to vector<8x256xf32>
    %51 = arith.mulf %48, %50 : vector<8x256xf32>
    %52 = arith.addf %47, %51 : vector<8x256xf32>
    %c1_27 = arith.constant 1 : index
    %c95_28 = arith.constant 95 : index
    %53 = vector.load %arg5[%c1_27, %c95_28] : memref<10x418xf32, #tpu.memory_space<vmem>>, vector<8x256xf32>
    %c9 = arith.constant 9 : index
    %c0_29 = arith.constant 0 : index
    %54 = vector.load %arg2[%c9, %c0_29] : memref<27x256xf32, #tpu.memory_space<vmem>>, vector<1x256xf32>
    %55 = vector.broadcast %54 : vector<1x256xf32> to vector<8x256xf32>
    %56 = arith.mulf %53, %55 : vector<8x256xf32>
    %57 = arith.addf %52, %56 : vector<8x256xf32>
    %c1_30 = arith.constant 1 : index
    %c96_31 = arith.constant 96 : index
    %58 = vector.load %arg5[%c1_30, %c96_31] : memref<10x418xf32, #tpu.memory_space<vmem>>, vector<8x256xf32>
    %c10 = arith.constant 10 : index
    %c0_32 = arith.constant 0 : index
    %59 = vector.load %arg2[%c10, %c0_32] : memref<27x256xf32, #tpu.memory_space<vmem>>, vector<1x256xf32>
    %60 = vector.broadcast %59 : vector<1x256xf32> to vector<8x256xf32>
    %61 = arith.mulf %58, %60 : vector<8x256xf32>
    %62 = arith.addf %57, %61 : vector<8x256xf32>
    %c1_33 = arith.constant 1 : index
    %c97_34 = arith.constant 97 : index
    %63 = vector.load %arg5[%c1_33, %c97_34] : memref<10x418xf32, #tpu.memory_space<vmem>>, vector<8x256xf32>
    %c11 = arith.constant 11 : index
    %c0_35 = arith.constant 0 : index
    %64 = vector.load %arg2[%c11, %c0_35] : memref<27x256xf32, #tpu.memory_space<vmem>>, vector<1x256xf32>
    %65 = vector.broadcast %64 : vector<1x256xf32> to vector<8x256xf32>
    %66 = arith.mulf %63, %65 : vector<8x256xf32>
    %67 = arith.addf %62, %66 : vector<8x256xf32>
    %c1_36 = arith.constant 1 : index
    %c127_37 = arith.constant 127 : index
    %68 = vector.load %arg5[%c1_36, %c127_37] : memref<10x418xf32, #tpu.memory_space<vmem>>, vector<8x256xf32>
    %c12 = arith.constant 12 : index
    %c0_38 = arith.constant 0 : index
    %69 = vector.load %arg2[%c12, %c0_38] : memref<27x256xf32, #tpu.memory_space<vmem>>, vector<1x256xf32>
    %70 = vector.broadcast %69 : vector<1x256xf32> to vector<8x256xf32>
    %71 = arith.mulf %68, %70 : vector<8x256xf32>
    %72 = arith.addf %67, %71 : vector<8x256xf32>
    %c1_39 = arith.constant 1 : index
    %c128_40 = arith.constant 128 : index
    %73 = vector.load %arg5[%c1_39, %c128_40] : memref<10x418xf32, #tpu.memory_space<vmem>>, vector<8x256xf32>
    %c13 = arith.constant 13 : index
    %c0_41 = arith.constant 0 : index
    %74 = vector.load %arg2[%c13, %c0_41] : memref<27x256xf32, #tpu.memory_space<vmem>>, vector<1x256xf32>
    %75 = vector.broadcast %74 : vector<1x256xf32> to vector<8x256xf32>
    %76 = arith.mulf %73, %75 : vector<8x256xf32>
    %77 = arith.addf %72, %76 : vector<8x256xf32>
    %c1_42 = arith.constant 1 : index
    %c129_43 = arith.constant 129 : index
    %78 = vector.load %arg5[%c1_42, %c129_43] : memref<10x418xf32, #tpu.memory_space<vmem>>, vector<8x256xf32>
    %c14 = arith.constant 14 : index
    %c0_44 = arith.constant 0 : index
    %79 = vector.load %arg2[%c14, %c0_44] : memref<27x256xf32, #tpu.memory_space<vmem>>, vector<1x256xf32>
    %80 = vector.broadcast %79 : vector<1x256xf32> to vector<8x256xf32>
    %81 = arith.mulf %78, %80 : vector<8x256xf32>
    %82 = arith.addf %77, %81 : vector<8x256xf32>
    %c1_45 = arith.constant 1 : index
    %c159_46 = arith.constant 159 : index
    %83 = vector.load %arg5[%c1_45, %c159_46] : memref<10x418xf32, #tpu.memory_space<vmem>>, vector<8x256xf32>
    %c15 = arith.constant 15 : index
    %c0_47 = arith.constant 0 : index
    %84 = vector.load %arg2[%c15, %c0_47] : memref<27x256xf32, #tpu.memory_space<vmem>>, vector<1x256xf32>
    %85 = vector.broadcast %84 : vector<1x256xf32> to vector<8x256xf32>
    %86 = arith.mulf %83, %85 : vector<8x256xf32>
    %87 = arith.addf %82, %86 : vector<8x256xf32>
    %c1_48 = arith.constant 1 : index
    %c160_49 = arith.constant 160 : index
    %88 = vector.load %arg5[%c1_48, %c160_49] : memref<10x418xf32, #tpu.memory_space<vmem>>, vector<8x256xf32>
    %c16 = arith.constant 16 : index
    %c0_50 = arith.constant 0 : index
    %89 = vector.load %arg2[%c16, %c0_50] : memref<27x256xf32, #tpu.memory_space<vmem>>, vector<1x256xf32>
    %90 = vector.broadcast %89 : vector<1x256xf32> to vector<8x256xf32>
    %91 = arith.mulf %88, %90 : vector<8x256xf32>
    %92 = arith.addf %87, %91 : vector<8x256xf32>
    %c1_51 = arith.constant 1 : index
    %c161_52 = arith.constant 161 : index
    %93 = vector.load %arg5[%c1_51, %c161_52] : memref<10x418xf32, #tpu.memory_space<vmem>>, vector<8x256xf32>
    %c17 = arith.constant 17 : index
    %c0_53 = arith.constant 0 : index
    %94 = vector.load %arg2[%c17, %c0_53] : memref<27x256xf32, #tpu.memory_space<vmem>>, vector<1x256xf32>
    %95 = vector.broadcast %94 : vector<1x256xf32> to vector<8x256xf32>
    %96 = arith.mulf %93, %95 : vector<8x256xf32>
    %97 = arith.addf %92, %96 : vector<8x256xf32>
    %c2_54 = arith.constant 2 : index
    %c95_55 = arith.constant 95 : index
    %98 = vector.load %arg5[%c2_54, %c95_55] : memref<10x418xf32, #tpu.memory_space<vmem>>, vector<8x256xf32>
    %c18 = arith.constant 18 : index
    %c0_56 = arith.constant 0 : index
    %99 = vector.load %arg2[%c18, %c0_56] : memref<27x256xf32, #tpu.memory_space<vmem>>, vector<1x256xf32>
    %100 = vector.broadcast %99 : vector<1x256xf32> to vector<8x256xf32>
    %101 = arith.mulf %98, %100 : vector<8x256xf32>
    %102 = arith.addf %97, %101 : vector<8x256xf32>
    %c2_57 = arith.constant 2 : index
    %c96_58 = arith.constant 96 : index
    %103 = vector.load %arg5[%c2_57, %c96_58] : memref<10x418xf32, #tpu.memory_space<vmem>>, vector<8x256xf32>
    %c19 = arith.constant 19 : index
    %c0_59 = arith.constant 0 : index
    %104 = vector.load %arg2[%c19, %c0_59] : memref<27x256xf32, #tpu.memory_space<vmem>>, vector<1x256xf32>
    %105 = vector.broadcast %104 : vector<1x256xf32> to vector<8x256xf32>
    %106 = arith.mulf %103, %105 : vector<8x256xf32>
    %107 = arith.addf %102, %106 : vector<8x256xf32>
    %c2_60 = arith.constant 2 : index
    %c97_61 = arith.constant 97 : index
    %108 = vector.load %arg5[%c2_60, %c97_61] : memref<10x418xf32, #tpu.memory_space<vmem>>, vector<8x256xf32>
    %c20 = arith.constant 20 : index
    %c0_62 = arith.constant 0 : index
    %109 = vector.load %arg2[%c20, %c0_62] : memref<27x256xf32, #tpu.memory_space<vmem>>, vector<1x256xf32>
    %110 = vector.broadcast %109 : vector<1x256xf32> to vector<8x256xf32>
    %111 = arith.mulf %108, %110 : vector<8x256xf32>
    %112 = arith.addf %107, %111 : vector<8x256xf32>
    %c2_63 = arith.constant 2 : index
    %c127_64 = arith.constant 127 : index
    %113 = vector.load %arg5[%c2_63, %c127_64] : memref<10x418xf32, #tpu.memory_space<vmem>>, vector<8x256xf32>
    %c21 = arith.constant 21 : index
    %c0_65 = arith.constant 0 : index
    %114 = vector.load %arg2[%c21, %c0_65] : memref<27x256xf32, #tpu.memory_space<vmem>>, vector<1x256xf32>
    %115 = vector.broadcast %114 : vector<1x256xf32> to vector<8x256xf32>
    %116 = arith.mulf %113, %115 : vector<8x256xf32>
    %117 = arith.addf %112, %116 : vector<8x256xf32>
    %c2_66 = arith.constant 2 : index
    %c128_67 = arith.constant 128 : index
    %118 = vector.load %arg5[%c2_66, %c128_67] : memref<10x418xf32, #tpu.memory_space<vmem>>, vector<8x256xf32>
    %c22 = arith.constant 22 : index
    %c0_68 = arith.constant 0 : index
    %119 = vector.load %arg2[%c22, %c0_68] : memref<27x256xf32, #tpu.memory_space<vmem>>, vector<1x256xf32>
    %120 = vector.broadcast %119 : vector<1x256xf32> to vector<8x256xf32>
    %121 = arith.mulf %118, %120 : vector<8x256xf32>
    %122 = arith.addf %117, %121 : vector<8x256xf32>
    %c2_69 = arith.constant 2 : index
    %c129_70 = arith.constant 129 : index
    %123 = vector.load %arg5[%c2_69, %c129_70] : memref<10x418xf32, #tpu.memory_space<vmem>>, vector<8x256xf32>
    %c23 = arith.constant 23 : index
    %c0_71 = arith.constant 0 : index
    %124 = vector.load %arg2[%c23, %c0_71] : memref<27x256xf32, #tpu.memory_space<vmem>>, vector<1x256xf32>
    %125 = vector.broadcast %124 : vector<1x256xf32> to vector<8x256xf32>
    %126 = arith.mulf %123, %125 : vector<8x256xf32>
    %127 = arith.addf %122, %126 : vector<8x256xf32>
    %c2_72 = arith.constant 2 : index
    %c159_73 = arith.constant 159 : index
    %128 = vector.load %arg5[%c2_72, %c159_73] : memref<10x418xf32, #tpu.memory_space<vmem>>, vector<8x256xf32>
    %c24 = arith.constant 24 : index
    %c0_74 = arith.constant 0 : index
    %129 = vector.load %arg2[%c24, %c0_74] : memref<27x256xf32, #tpu.memory_space<vmem>>, vector<1x256xf32>
    %130 = vector.broadcast %129 : vector<1x256xf32> to vector<8x256xf32>
    %131 = arith.mulf %128, %130 : vector<8x256xf32>
    %132 = arith.addf %127, %131 : vector<8x256xf32>
    %c2_75 = arith.constant 2 : index
    %c160_76 = arith.constant 160 : index
    %133 = vector.load %arg5[%c2_75, %c160_76] : memref<10x418xf32, #tpu.memory_space<vmem>>, vector<8x256xf32>
    %c25 = arith.constant 25 : index
    %c0_77 = arith.constant 0 : index
    %134 = vector.load %arg2[%c25, %c0_77] : memref<27x256xf32, #tpu.memory_space<vmem>>, vector<1x256xf32>
    %135 = vector.broadcast %134 : vector<1x256xf32> to vector<8x256xf32>
    %136 = arith.mulf %133, %135 : vector<8x256xf32>
    %137 = arith.addf %132, %136 : vector<8x256xf32>
    %c2_78 = arith.constant 2 : index
    %c161_79 = arith.constant 161 : index
    %138 = vector.load %arg5[%c2_78, %c161_79] : memref<10x418xf32, #tpu.memory_space<vmem>>, vector<8x256xf32>
    %c26 = arith.constant 26 : index
    %c0_80 = arith.constant 0 : index
    %139 = vector.load %arg2[%c26, %c0_80] : memref<27x256xf32, #tpu.memory_space<vmem>>, vector<1x256xf32>
    %140 = vector.broadcast %139 : vector<1x256xf32> to vector<8x256xf32>
    %141 = arith.mulf %138, %140 : vector<8x256xf32>
    %142 = arith.addf %137, %141 : vector<8x256xf32>
    %c0_81 = arith.constant 0 : index
    %c0_82 = arith.constant 0 : index
    %c0_83 = arith.constant 0 : index
    %143 = vector.load %arg4[%c0_81, %c0_82, %c0_83] : memref<1x8x256xf32, #tpu.memory_space<vmem>>, vector<1x8x256xf32>
    %144 = vector.shape_cast %143 : vector<1x8x256xf32> to vector<8x256xf32>
    %145 = vector.shape_cast %142 : vector<8x256xf32> to vector<1x8x256xf32>
    tpu.vector_store %arg4[%c0_81, %c0_82, %c0_83], %145 {strides = array<i32>} : memref<1x8x256xf32, #tpu.memory_space<vmem>>, vector<1x8x256xf32>,
    return
  }
  func.func @transform_0(%arg0: i32) -> (i32, i32, i32) {
    %c0_i32 = arith.constant 0 : i32
    %c0_i32_0 = arith.constant 0 : i32
    %c0_i32_1 = arith.constant 0 : i32
    return %arg0, %c0_i32, %c0_i32_0 : i32, i32, i32
  }
  func.func @transform_1(%arg0: i32) -> (i32, i32) {
    %c0_i32 = arith.constant 0 : i32
    %c0_i32_0 = arith.constant 0 : i32
    %c0_i32_1 = arith.constant 0 : i32
    return %c0_i32, %c0_i32_0 : i32, i32
  }
  func.func @transform_2(%arg0: i32) -> (i32, i32) {
    %c0_i32 = arith.constant 0 : i32
    %c0_i32_0 = arith.constant 0 : i32
    %c0_i32_1 = arith.constant 0 : i32
    return %c0_i32, %c0_i32_0 : i32, i32
  }
  func.func @transform_3(%arg0: i32) -> (i32, i32, i32) {
    %c0_i32 = arith.constant 0 : i32
    %c0_i32_0 = arith.constant 0 : i32
    %c0_i32_1 = arith.constant 0 : i32
    return %arg0, %c0_i32, %c0_i32_0 : i32, i32, i32
  }
}

</mosaic_0001>

<llo_original>
// kernel: tile.14
$region0: #{tile.14}
  %s0 = inlined_call_operand.vmem [shape: f32[9,1,3,8,32], index: 0, kind: input, shape index: {}]
  %s1 = inlined_call_operand.vmem [shape: f32[27,256], index: 1, kind: output, shape index: {}]
  %v2 = vld [vmem:[%s0] ss:$4 sm:$0xff]
  %vm3 = vcmask 261120
  %4 = vst.msk [vmem:[%s1] ss:$8 sm:$0x3] %vm3, %v2
  %s5 = scalar_lea.vmem %s1, 4294967281
  %6 = vst.msk [vmem:[%s5] ss:$8 sm:$0xc] %vm3, %v2
  %s7 = scalar_lea.vmem %s1, 4294967266
  %8 = vst.msk [vmem:[%s7] ss:$8 sm:$0x30] %vm3, %v2
  %s9 = scalar_lea.vmem %s1, 4294967251
  %10 = vst.msk [vmem:[%s9] ss:$8 sm:$0xc0] %vm3, %v2
  %s11 = scalar_lea.vmem %s0, 32
  %v12 = vld [vmem:[%s11] ss:$4 sm:$0xff]
  %vm13 = vcmask 261120
  %s14 = scalar_lea.vmem %s1, 4
  %15 = vst.msk [vmem:[%s14] ss:$8 sm:$0x3] %vm13, %v12
  %s16 = scalar_lea.vmem %s1, 4294967285
  %17 = vst.msk [vmem:[%s16] ss:$8 sm:$0xc] %vm13, %v12
  %s18 = scalar_lea.vmem %s1, 4294967270
  %19 = vst.msk [vmem:[%s18] ss:$8 sm:$0x30] %vm13, %v12
  %s20 = scalar_lea.vmem %s1, 4294967255
  %21 = vst.msk [vmem:[%s20] ss:$8 sm:$0xc0] %vm13, %v12
  %s22 = scalar_lea.vmem %s0, 64
  %v23 = vld [vmem:[%s22] ss:$4 sm:$0xff]
  %vm24 = vcmask 261120
  %s25 = scalar_lea.vmem %s1, 16
  %26 = vst.msk [vmem:[%s25] ss:$8 sm:$0x3] %vm24, %v23
  %s27 = scalar_lea.vmem %s1, 1
  %28 = vst.msk [vmem:[%s27] ss:$8 sm:$0xc] %vm24, %v23
  %s29 = scalar_lea.vmem %s1, 4294967282
  %30 = vst.msk [vmem:[%s29] ss:$8 sm:$0x30] %vm24, %v23
  %s31 = scalar_lea.vmem %s1, 4294967267
  %32 = vst.msk [vmem:[%s31] ss:$8 sm:$0xc0] %vm24, %v23
  %s33 = scalar_lea.vmem %s0, 96
  %v34 = vld [vmem:[%s33] ss:$4 sm:$0xff]
  %vm35 = vcmask 261120
  %s36 = scalar_lea.vmem %s1, 20
  %37 = vst.msk [vmem:[%s36] ss:$8 sm:$0x3] %vm35, %v34
  %s38 = scalar_lea.vmem %s1, 5
  %39 = vst.msk [vmem:[%s38] ss:$8 sm:$0xc] %vm35, %v34
  %s40 = scalar_lea.vmem %s1, 4294967286
  %41 = vst.msk [vmem:[%s40] ss:$8 sm:$0x30] %vm35, %v34
  %s42 = scalar_lea.vmem %s1, 4294967271
  %43 = vst.msk [vmem:[%s42] ss:$8 sm:$0xc0] %vm35, %v34
  %s44 = scalar_lea.vmem %s0, 128
  %v45 = vld [vmem:[%s44] ss:$4 sm:$0xff]
  %vm46 = vcmask 261120
  %s47 = scalar_lea.vmem %s1, 32
  %48 = vst.msk [vmem:[%s47] ss:$8 sm:$0x3] %vm46, %v45
  %s49 = scalar_lea.vmem %s1, 17
  %50 = vst.msk [vmem:[%s49] ss:$8 sm:$0xc] %vm46, %v45
  %s51 = scalar_lea.vmem %s1, 2
  %52 = vst.msk [vmem:[%s51] ss:$8 sm:$0x30] %vm46, %v45
  %s53 = scalar_lea.vmem %s1, 4294967283
  %54 = vst.msk [vmem:[%s53] ss:$8 sm:$0xc0] %vm46, %v45
  %s55 = scalar_lea.vmem %s0, 160
  %v56 = vld [vmem:[%s55] ss:$4 sm:$0xff]
  %vm57 = vcmask 261120
  %s58 = scalar_lea.vmem %s1, 36
  %59 = vst.msk [vmem:[%s58] ss:$8 sm:$0x3] %vm57, %v56
  %s60 = scalar_lea.vmem %s1, 21
  %61 = vst.msk [vmem:[%s60] ss:$8 sm:$0xc] %vm57, %v56
  %s62 = scalar_lea.vmem %s1, 6
  %63 = vst.msk [vmem:[%s62] ss:$8 sm:$0x30] %vm57, %v56
  %s64 = scalar_lea.vmem %s1, 4294967287
  %65 = vst.msk [vmem:[%s64] ss:$8 sm:$0xc0] %vm57, %v56
  %s66 = scalar_lea.vmem %s0, 192
  %v67 = vld [vmem:[%s66] ss:$4 sm:$0x3f]
  %vm68 = vcmask 261120
  %s69 = scalar_lea.vmem %s1, 48
  %70 = vst.msk [vmem:[%s69] ss:$8 sm:$0x3] %vm68, %v67
  %s71 = scalar_lea.vmem %s1, 33
  %72 = vst.msk [vmem:[%s71] ss:$8 sm:$0xc] %vm68, %v67
  %s73 = scalar_lea.vmem %s1, 18
  %74 = vst.msk [vmem:[%s73] ss:$8 sm:$0x30] %vm68, %v67
  %s75 = scalar_lea.vmem %s0, 3
  %v76 = vld [vmem:[%s75] ss:$8 sm:$0xf]
  %s77 = scalar_lea.vmem %s0, 3
  %v78 = vld [vmem:[%s77] ss:$8 sm:$0xf0]
  %vm79 = vcmask 1047556
  %v80 = vsel %vm79, %v78, %v76
  %81 = vrot.lane.b32.xlu0 %v80, 96
  %v82 = vpop.permute.xlu0 %81
  %vm83 = vcmask 1048320
  %84 = vst.msk [vmem:[%s1] sm:$0xff] %vm83, %v82
  %s85 = scalar_lea.vmem %s0, 131
  %v86 = vld [vmem:[%s85] ss:$8 sm:$0xf]
  %s87 = scalar_lea.vmem %s0, 131
  %v88 = vld [vmem:[%s87] ss:$8 sm:$0xf0]
  %vm89 = vcmask 1047556
  %v90 = vsel %vm89, %v88, %v86
  %91 = vrot.lane.b32.xlu0 %v90, 96
  %v92 = vpop.permute.xlu0 %91
  %vm93 = vcmask 1048320
  %s94 = scalar_lea.vmem %s1, 32
  %95 = vst.msk [vmem:[%s94] sm:$0xff] %vm93, %v92
  %s96 = scalar_lea.vmem %s0, 7
  %v97 = vld [vmem:[%s96] ss:$8 sm:$0xf]
  %s98 = scalar_lea.vmem %s0, 7
  %v99 = vld [vmem:[%s98] ss:$8 sm:$0xf0]
  %vm100 = vcmask 1047556
  %v101 = vsel %vm100, %v99, %v97
  %102 = vrot.lane.b32.xlu0 %v101, 96
  %v103 = vpop.permute.xlu0 %102
  %vm104 = vcmask 1048320
  %s105 = scalar_lea.vmem %s1, 8
  %106 = vst.msk [vmem:[%s105] sm:$0xff] %vm104, %v103
  %s107 = scalar_lea.vmem %s0, 135
  %v108 = vld [vmem:[%s107] ss:$8 sm:$0xf]
  %s109 = scalar_lea.vmem %s0, 135
  %v110 = vld [vmem:[%s109] ss:$8 sm:$0xf0]
  %vm111 = vcmask 1047556
  %v112 = vsel %vm111, %v110, %v108
  %113 = vrot.lane.b32.xlu0 %v112, 96
  %v114 = vpop.permute.xlu0 %113
  %vm115 = vcmask 1048320
  %s116 = scalar_lea.vmem %s1, 40
  %117 = vst.msk [vmem:[%s116] sm:$0xff] %vm115, %v114
  %s118 = scalar_lea.vmem %s0, 67
  %v119 = vld [vmem:[%s118] ss:$8 sm:$0xf]
  %s120 = scalar_lea.vmem %s0, 67
  %v121 = vld [vmem:[%s120] ss:$8 sm:$0xf0]
  %vm122 = vcmask 1047556
  %v123 = vsel %vm122, %v121, %v119
  %124 = vrot.lane.b32.xlu0 %v123, 96
  %v125 = vpop.permute.xlu0 %124
  %vm126 = vcmask 1048320
  %s127 = scalar_lea.vmem %s1, 16
  %128 = vst.msk [vmem:[%s127] sm:$0xff] %vm126, %v125
  %s129 = scalar_lea.vmem %s0, 195
  %v130 = vld [vmem:[%s129] ss:$8 sm:$0x7]
  %s131 = scalar_lea.vmem %s0, 47
  %v132 = vld [vmem:[%s131] ss:$8 sm:$0x78]
  %vm133 = vcmask 1046531
  %v134 = vsel %vm133, %v132, %v130
  %s135 = scalar_lea.vmem %s0, 96
  %v136 = vld [vmem:[%s135] sm:$0x80]
  %vm137 = vcmask 1047559
  %v138 = vsel %vm137, %v136, %v134
  %139 = vrot.lane.b32.xlu0 %v138, 96
  %v140 = vpop.permute.xlu0 %139
  %vm141 = vcmask 1048320
  %s142 = scalar_lea.vmem %s1, 48
  %143 = vst.msk [vmem:[%s142] sm:$0x7] %vm141, %v140
  %s144 = scalar_lea.vmem %s1, 21
  %145 = vst.msk [vmem:[%s144] sm:$0xf8] %vm141, %v140
  %s146 = scalar_lea.vmem %s0, 199
  %v147 = vld [vmem:[%s146] ss:$8 sm:$0x7]
  %s148 = scalar_lea.vmem %s0, 87
  %v149 = vld [vmem:[%s148] ss:$8 sm:$0x38]
  %vm150 = vcmask 1045507
  %v151 = vsel %vm150, %v149, %v147
  %152 = vrot.lane.b32.xlu0 %v151, 96
  %v153 = vpop.permute.xlu0 %152
  %vm154 = vcmask 1048320
  %s155 = scalar_lea.vmem %s1, 56
  %156 = vst.msk [vmem:[%s155] sm:$0x7] %vm154, %v153
  %s157 = scalar_lea.vmem %s1, 26
  %158 = vst.msk [vmem:[%s157] sm:$0x38] %vm154, %v153
  %s159 = scalar_lea.vmem %s0, 2
  %v160 = vld [vmem:[%s159] ss:$8 sm:$0xf]
  %s161 = scalar_lea.vmem %s0, 2
  %v162 = vld [vmem:[%s161] ss:$8 sm:$0xf0]
  %vm163 = vcmask 1047556
  %v164 = vsel %vm163, %v162, %v160
  %165 = vrot.lane.b32.xlu0 %v164, 64
  %v166 = vpop.permute.xlu0 %165
  %vm167 = vcmask 785920
  %168 = vst.msk [vmem:[%s1] sm:$0xff] %vm167, %v166
  %s169 = scalar_lea.vmem %s0, 130
  %v170 = vld [vmem:[%s169] ss:$8 sm:$0xf]
  %s171 = scalar_lea.vmem %s0, 130
  %v172 = vld [vmem:[%s171] ss:$8 sm:$0xf0]
  %vm173 = vcmask 1047556
  %v174 = vsel %vm173, %v172, %v170
  %175 = vrot.lane.b32.xlu0 %v174, 64
  %v176 = vpop.permute.xlu0 %175
  %vm177 = vcmask 785920
  %s178 = scalar_lea.vmem %s1, 32
  %179 = vst.msk [vmem:[%s178] sm:$0xff] %vm177, %v176
  %s180 = scalar_lea.vmem %s0, 6
  %v181 = vld [vmem:[%s180] ss:$8 sm:$0xf]
  %s182 = scalar_lea.vmem %s0, 6
  %v183 = vld [vmem:[%s182] ss:$8 sm:$0xf0]
  %vm184 = vcmask 1047556
  %v185 = vsel %vm184, %v183, %v181
  %186 = vrot.lane.b32.xlu0 %v185, 64
  %v187 = vpop.permute.xlu0 %186
  %vm188 = vcmask 785920
  %s189 = scalar_lea.vmem %s1, 8
  %190 = vst.msk [vmem:[%s189] sm:$0xff] %vm188, %v187
  %s191 = scalar_lea.vmem %s0, 134
  %v192 = vld [vmem:[%s191] ss:$8 sm:$0xf]
  %s193 = scalar_lea.vmem %s0, 134
  %v194 = vld [vmem:[%s193] ss:$8 sm:$0xf0]
  %vm195 = vcmask 1047556
  %v196 = vsel %vm195, %v194, %v192
  %197 = vrot.lane.b32.xlu0 %v196, 64
  %v198 = vpop.permute.xlu0 %197
  %vm199 = vcmask 785920
  %s200 = scalar_lea.vmem %s1, 40
  %201 = vst.msk [vmem:[%s200] sm:$0xff] %vm199, %v198
  %s202 = scalar_lea.vmem %s0, 66
  %v203 = vld [vmem:[%s202] ss:$8 sm:$0xf]
  %s204 = scalar_lea.vmem %s0, 66
  %v205 = vld [vmem:[%s204] ss:$8 sm:$0xf0]
  %vm206 = vcmask 1047556
  %v207 = vsel %vm206, %v205, %v203
  %208 = vrot.lane.b32.xlu0 %v207, 64
  %v209 = vpop.permute.xlu0 %208
  %vm210 = vcmask 785920
  %s211 = scalar_lea.vmem %s1, 16
  %212 = vst.msk [vmem:[%s211] sm:$0xff] %vm210, %v209
  %s213 = scalar_lea.vmem %s0, 194
  %v214 = vld [vmem:[%s213] ss:$8 sm:$0x7]
  %s215 = scalar_lea.vmem %s0, 46
  %v216 = vld [vmem:[%s215] ss:$8 sm:$0x78]
  %vm217 = vcmask 1046531
  %v218 = vsel %vm217, %v216, %v214
  %s219 = scalar_lea.vmem %s0, 95
  %v220 = vld [vmem:[%s219] sm:$0x80]
  %vm221 = vcmask 1047559
  %v222 = vsel %vm221, %v220, %v218
  %223 = vrot.lane.b32.xlu0 %v222, 64
  %v224 = vpop.permute.xlu0 %223
  %vm225 = vcmask 785920
  %s226 = scalar_lea.vmem %s1, 48
  %227 = vst.msk [vmem:[%s226] sm:$0x7] %vm225, %v224
  %s228 = scalar_lea.vmem %s1, 21
  %229 = vst.msk [vmem:[%s228] sm:$0xf8] %vm225, %v224
  %s230 = scalar_lea.vmem %s0, 198
  %v231 = vld [vmem:[%s230] ss:$8 sm:$0x7]
  %s232 = scalar_lea.vmem %s0, 86
  %v233 = vld [vmem:[%s232] ss:$8 sm:$0x38]
  %vm234 = vcmask 1045507
  %v235 = vsel %vm234, %v233, %v231
  %236 = vrot.lane.b32.xlu0 %v235, 64
  %v237 = vpop.permute.xlu0 %236
  %vm238 = vcmask 785920
  %s239 = scalar_lea.vmem %s1, 56
  %240 = vst.msk [vmem:[%s239] sm:$0x7] %vm238, %v237
  %s241 = scalar_lea.vmem %s1, 26
  %242 = vst.msk [vmem:[%s241] sm:$0x38] %vm238, %v237
  %s243 = scalar_lea.vmem %s0, 1
  %v244 = vld [vmem:[%s243] ss:$8 sm:$0xf]
  %s245 = scalar_lea.vmem %s0, 1
  %v246 = vld [vmem:[%s245] ss:$8 sm:$0xf0]
  %vm247 = vcmask 1047556
  %v248 = vsel %vm247, %v246, %v244
  %249 = vrot.lane.b32.xlu0 %v248, 32
  %v250 = vpop.permute.xlu0 %249
  %vm251 = vcmask 523520
  %252 = vst.msk [vmem:[%s1] sm:$0xff] %vm251, %v250
  %s253 = scalar_lea.vmem %s0, 129
  %v254 = vld [vmem:[%s253] ss:$8 sm:$0xf]
  %s255 = scalar_lea.vmem %s0, 129
  %v256 = vld [vmem:[%s255] ss:$8 sm:$0xf0]
  %vm257 = vcmask 1047556
  %v258 = vsel %vm257, %v256, %v254
  %259 = vrot.lane.b32.xlu0 %v258, 32
  %v260 = vpop.permute.xlu0 %259
  %vm261 = vcmask 523520
  %s262 = scalar_lea.vmem %s1, 32
  %263 = vst.msk [vmem:[%s262] sm:$0xff] %vm261, %v260
  %s264 = scalar_lea.vmem %s0, 5
  %v265 = vld [vmem:[%s264] ss:$8 sm:$0xf]
  %s266 = scalar_lea.vmem %s0, 5
  %v267 = vld [vmem:[%s266] ss:$8 sm:$0xf0]
  %vm268 = vcmask 1047556
  %v269 = vsel %vm268, %v267, %v265
  %270 = vrot.lane.b32.xlu0 %v269, 32
  %v271 = vpop.permute.xlu0 %270
  %vm272 = vcmask 523520
  %s273 = scalar_lea.vmem %s1, 8
  %274 = vst.msk [vmem:[%s273] sm:$0xff] %vm272, %v271
  %s275 = scalar_lea.vmem %s0, 133
  %v276 = vld [vmem:[%s275] ss:$8 sm:$0xf]
  %s277 = scalar_lea.vmem %s0, 133
  %v278 = vld [vmem:[%s277] ss:$8 sm:$0xf0]
  %vm279 = vcmask 1047556
  %v280 = vsel %vm279, %v278, %v276
  %281 = vrot.lane.b32.xlu0 %v280, 32
  %v282 = vpop.permute.xlu0 %281
  %vm283 = vcmask 523520
  %s284 = scalar_lea.vmem %s1, 40
  %285 = vst.msk [vmem:[%s284] sm:$0xff] %vm283, %v282
  %s286 = scalar_lea.vmem %s0, 65
  %v287 = vld [vmem:[%s286] ss:$8 sm:$0xf]
  %s288 = scalar_lea.vmem %s0, 65
  %v289 = vld [vmem:[%s288] ss:$8 sm:$0xf0]
  %vm290 = vcmask 1047556
  %v291 = vsel %vm290, %v289, %v287
  %292 = vrot.lane.b32.xlu0 %v291, 32
  %v293 = vpop.permute.xlu0 %292
  %vm294 = vcmask 523520
  %s295 = scalar_lea.vmem %s1, 16
  %296 = vst.msk [vmem:[%s295] sm:$0xff] %vm294, %v293
  %s297 = scalar_lea.vmem %s0, 193
  %v298 = vld [vmem:[%s297] ss:$8 sm:$0x7]
  %s299 = scalar_lea.vmem %s0, 45
  %v300 = vld [vmem:[%s299] ss:$8 sm:$0x78]
  %vm301 = vcmask 1046531
  %v302 = vsel %vm301, %v300, %v298
  %s303 = scalar_lea.vmem %s0, 94
  %v304 = vld [vmem:[%s303] sm:$0x80]
  %vm305 = vcmask 1047559
  %v306 = vsel %vm305, %v304, %v302
  %307 = vrot.lane.b32.xlu0 %v306, 32
  %v308 = vpop.permute.xlu0 %307
  %vm309 = vcmask 523520
  %s310 = scalar_lea.vmem %s1, 48
  %311 = vst.msk [vmem:[%s310] sm:$0x7] %vm309, %v308
  %s312 = scalar_lea.vmem %s1, 21
  %313 = vst.msk [vmem:[%s312] sm:$0xf8] %vm309, %v308
  %s314 = scalar_lea.vmem %s0, 197
  %v315 = vld [vmem:[%s314] ss:$8 sm:$0x7]
  %s316 = scalar_lea.vmem %s0, 85
  %v317 = vld [vmem:[%s316] ss:$8 sm:$0x38]
  %vm318 = vcmask 1045507
  %v319 = vsel %vm318, %v317, %v315
  %320 = vrot.lane.b32.xlu0 %v319, 32
  %v321 = vpop.permute.xlu0 %320
  %vm322 = vcmask 523520
  %s323 = scalar_lea.vmem %s1, 56
  %324 = vst.msk [vmem:[%s323] sm:$0x7] %vm322, %v321
  %s325 = scalar_lea.vmem %s1, 26
  %326 = vst.msk [vmem:[%s325] sm:$0x38] %vm322, %v321

// kernel: tile.18
$region0: #{tile.18}
  #allocation0 [shape = 's32[1]{0}', space=sflag, size = 0x4, scoped, tag = 'scoped memory for tile.18']
  %s0 = inlined_call_operand.vmem [shape: f32[32], index: 0, kind: input, shape index: {}]
  %s1 = inlined_call_operand.vmem [shape: f32[8,32], index: 1, kind: output, shape index: {}]
  // Predicated region
  $region2: #{tile.18} parent=0 // pred_check
    _
  $region3: #{tile.18} parent=0 // pred_check_branch
    %3 = sbr.rel (0) target = $region5
  $region4: #{tile.18} parent=0 // pred_region
    _
  $region5: #{tile.18} parent=0 // pred_fallthru
    _
  %v4 = vld [vmem:[%s0] ss:$0 sm:$0xff]
  %5 = vst [vmem:[%s1] sm:$0xff] %v4

// kernel: tile.19
$region0: #{tile.19}
  %s0 = inlined_call_operand.vmem [shape: f32[8,32], index: 0, kind: input, shape index: {}]
  %s1 = inlined_call_operand.vmem [shape: f32[1,256], index: 1, kind: output, shape index: {}]
  $region1: #{tile.19} parent=0
    #allocation0 [shape = 'u8[8192]{0}', space=vmem, size = 0x2000, scoped, tag = 'scoped mem for output reshape']
    %s2 = smov 3
    %v3 = vld [vmem:[%s0] ss:$4 sm:%s2]
    %vm4 = vcmask 261120
    %5 = vst.msk [vmem:[#allocation0] ss:$8 sm:$0x3] %vm4, %v3
    %s6 = scalar_lea.vmem %s0, 3
    %s7 = smov 3
    %v8 = vld [vmem:[%s6] ss:$4 sm:%s7]
    %9 = vrot.lane.b32.xlu0 %v8, 96
    %v10 = vpop.permute.xlu0 %9
    %vm11 = vcmask 1048320
    %12 = vst.msk [vmem:[#allocation0] ss:$8 sm:$0x3] %vm11, %v10
    %s13 = scalar_lea.vmem %s0, 2
    %s14 = smov 3
    %v15 = vld [vmem:[%s13] ss:$4 sm:%s14]
    %16 = vrot.lane.b32.xlu0 %v15, 64
    %v17 = vpop.permute.xlu0 %16
    %vm18 = vcmask 785920
    %19 = vst.msk [vmem:[#allocation0] ss:$8 sm:$0x3] %vm18, %v17
    %s20 = scalar_lea.vmem %s0, 1
    %s21 = smov 3
    %v22 = vld [vmem:[%s20] ss:$4 sm:%s21]
    %23 = vrot.lane.b32.xlu0 %v22, 32
    %v24 = vpop.permute.xlu0 %23
    %vm25 = vcmask 523520
    %26 = vst.msk [vmem:[#allocation0] ss:$8 sm:$0x3] %vm25, %v24
    %s28 = sshll.u32 1, 1
    %s29 = ssub.s32 %s28, 1
    %v31 = vld [vmem:[#allocation0] sm:%s29]
    %s32 = sshll.u32 1, 1
    %s33 = ssub.s32 %s32, 1
    %34 = vst [vmem:[%s1] sm:%s33] %v31
    %s35 = scalar_lea.vmem [#allocation0], 8
    %v36 = vld [vmem:[%s35] sm:%s29]
    %s37 = sshll.u32 1, 1
    %s38 = ssub.s32 %s37, 1
    %s39 = scalar_lea.vmem %s1, 1
    %40 = vst [vmem:[%s39] sm:%s38] %v36

// kernel: dwconv_forward.1
$region0: #{dwconv_forward.1}
  #allocation0 [shape = 'u32[]', space=smem, size = 0x4, offset = 0x4, fixed_abs, tag = 'smem constant byte address 0x4 - core index']
  #allocation1 [shape = 'u32[144,128]{1,0:T(1,128)}', space=vmem, size = 0x12000, scoped, tag = 'internal scratch']
  #allocation2 [shape = 'f32[10,418]{1,0:T(8,128)}', space=vmem, size = 0x8000, scoped, tag = 'scratch operand']
  %s0 = inlined_call_operand.vmem [shape: f32[2,8,256], index: 0, kind: input, shape index: {}]
  %s1 = inlined_call_operand.vmem [shape: f32[27,256], index: 1, kind: input, shape index: {}]
  %s2 = inlined_call_operand.vmem [shape: f32[1,256], index: 2, kind: input, shape index: {}]
  %s3 = inlined_call_operand.vmem [shape: f32[2,8,256], index: 3, kind: output, shape index: {}]
  %s4 = sld [smem:[#allocation0]]
  $region45: #{dwconv_forward.1} parent=0
    _
  %s6 = ssub.s32 1, %s4
  %s7 = scalar_select 0, %s6, %s4
  loop: start=0, step=1, limit=4
  $region2: #{dwconv_forward.1} parent=0 // loop_pre_header
    _
  $region3: #{dwconv_forward.1} parent=0 // loop_header
    %s9 = sphi 0, %s13
    %p10 = scmp.ge.s32.totalorder %s9, 4
    %s19 = sphi 0, %s21
    %s22 = sphi 0, %s19
    %s23 = sphi 0, %s22
    %s39 = sphi 0, %s23
    %s43 = sphi 0, %s43
    %s45 = sphi 0, %s43
    %s46 = sphi 0, %s45
    %s60 = sphi 0, %s46
    %s64 = sphi 0, %s64
    %s66 = sphi 0, %s64
    %s67 = sphi 0, %s66
    %s81 = sphi 0, %s67
    %s87 = sphi 0, %s89
    %s90 = sphi 0, %s87
    %s91 = sphi 0, %s90
    %s107 = sphi 0, %s91
  $region4: #{dwconv_forward.1} parent=0 // loop_header_branch
    %12 = sbr.rel (%p10) target = $region8
  $region5: #{dwconv_forward.1} parent=0 // loop_body
    %s14 = ssub.s32 %s9, 1
    %s15 = ssub.s32 %s9, 2
    %s16 = sadd.s32 %s9, 1
    %s17 = ssub.s32 %s9, %s16
    %p18 = scmp.eq.s32.totalorder %s17, 0
    %s20 = sadd.s32 %s19, 1
    %s21 = scalar_select %p18, %s19, %s20
    %p24 = pneg %p18
    %p25 = scmp.eq.s32.totalorder %s9, 1
    %p26 = por %p24, %p25
    %p27 = scmp.ne.s32.totalorder %s19, %s22
    %p28 = scmp.eq.s32.totalorder %s9, 0
    %p29 = por %p27, %p28
    %p30 = scmp.ne.s32.totalorder %s19, %s22
    %p31 = scmp.eq.s32.totalorder %s14, 1
    %p32 = por %p30, %p31
    %p33 = scmp.ne.s32.totalorder %s22, %s23
    %p34 = scmp.eq.s32.totalorder %s14, 0
    %p35 = por %p33, %p34
    %p36 = scmp.ne.s32.totalorder %s22, %s23
    %p37 = scmp.eq.s32.totalorder %s15, 1
    %p38 = por %p36, %p37
    %p40 = scmp.ne.s32.totalorder %s23, %s39
    %p41 = scmp.eq.s32.totalorder %s15, 0
    %p42 = por %p40, %p41
    %s44 = sadd.s32 %s43, 1
    %p47 = scmp.eq.s32.totalorder %s9, 1
    %p48 = scmp.ne.s32.totalorder %s43, %s45
    %p49 = scmp.eq.s32.totalorder %s9, 0
    %p50 = por %p48, %p49
    %p51 = scmp.ne.s32.totalorder %s43, %s45
    %p52 = scmp.eq.s32.totalorder %s14, 1
    %p53 = por %p51, %p52
    %p54 = scmp.ne.s32.totalorder %s45, %s46
    %p55 = scmp.eq.s32.totalorder %s14, 0
    %p56 = por %p54, %p55
    %p57 = scmp.ne.s32.totalorder %s45, %s46
    %p58 = scmp.eq.s32.totalorder %s15, 1
    %p59 = por %p57, %p58
    %p61 = scmp.ne.s32.totalorder %s46, %s60
    %p62 = scmp.eq.s32.totalorder %s15, 0
    %p63 = por %p61, %p62
    %s65 = sadd.s32 %s64, 1
    %p68 = scmp.eq.s32.totalorder %s9, 1
    %p69 = scmp.ne.s32.totalorder %s64, %s66
    %p70 = scmp.eq.s32.totalorder %s9, 0
    %p71 = por %p69, %p70
    %p72 = scmp.ne.s32.totalorder %s64, %s66
    %p73 = scmp.eq.s32.totalorder %s14, 1
    %p74 = por %p72, %p73
    %p75 = scmp.ne.s32.totalorder %s66, %s67
    %p76 = scmp.eq.s32.totalorder %s14, 0
    %p77 = por %p75, %p76
    %p78 = scmp.ne.s32.totalorder %s66, %s67
    %p79 = scmp.eq.s32.totalorder %s15, 1
    %p80 = por %p78, %p79
    %p82 = scmp.ne.s32.totalorder %s67, %s81
    %p83 = scmp.eq.s32.totalorder %s15, 0
    %p84 = por %p82, %p83
    %s85 = ssub.s32 %s9, %s16
    %p86 = scmp.eq.s32.totalorder %s85, 0
    %s88 = sadd.s32 %s87, 1
    %s89 = scalar_select %p86, %s87, %s88
    %p92 = pneg %p86
    %p93 = scmp.eq.s32.totalorder %s9, 1
    %p94 = por %p92, %p93
    %p95 = scmp.ne.s32.totalorder %s87, %s90
    %p96 = scmp.eq.s32.totalorder %s9, 0
    %p97 = por %p95, %p96
    %p98 = scmp.ne.s32.totalorder %s87, %s90
    %p99 = scmp.eq.s32.totalorder %s14, 1
    %p100 = por %p98, %p99
    %p101 = scmp.ne.s32.totalorder %s90, %s91
    %p102 = scmp.eq.s32.totalorder %s14, 0
    %p103 = por %p101, %p102
    %p104 = scmp.ne.s32.totalorder %s90, %s91
    %p105 = scmp.eq.s32.totalorder %s15, 1
    %p106 = por %p104, %p105
    %p108 = scmp.ne.s32.totalorder %s91, %s107
    %p109 = scmp.eq.s32.totalorder %s15, 0
    %p110 = por %p108, %p109
    %p111 = scmp.le.s32.totalorder 1, %s9
    %p112 = scmp.lt.s32.totalorder %s9, 3
    %p113 = pnand %p111, %p112
    %p114 = pneg %p113
    // Predicated region
    $region9: #{dwconv_forward.1} parent=5 // pred_check
      _
    $region10: #{dwconv_forward.1} parent=5 // pred_check_branch
      %116 = sbr.rel (%p113) target = $region12
    $region11: #{dwconv_forward.1} parent=5 // pred_region
      %s117 = ssub.s32 %s9, 1
      // Predicated region
      $region13: #{dwconv_forward.1} parent=11 // pred_check
        %p118 = pneg %p56
      $region14: #{dwconv_forward.1} parent=11 // pred_check_branch
        %120 = sbr.rel (%p118) target = $region16
      $region15: #{dwconv_forward.1} parent=11 // pred_region
        _
      $region16: #{dwconv_forward.1} parent=11 // pred_fallthru
        _
      // Predicated region
      $region17: #{dwconv_forward.1} parent=11 // pred_check
        %p121 = pneg %p77
      $region18: #{dwconv_forward.1} parent=11 // pred_check_branch
        %123 = sbr.rel (%p121) target = $region20
      $region19: #{dwconv_forward.1} parent=11 // pred_region
        _
      $region20: #{dwconv_forward.1} parent=11 // pred_fallthru
        _
    $region12: #{dwconv_forward.1} parent=5 // pred_fallthru
      _
    %p124 = scmp.lt.s32.totalorder %s9, 2
    // Predicated region
    $region21: #{dwconv_forward.1} parent=5 // pred_check
      %p125 = pneg %p124
    $region22: #{dwconv_forward.1} parent=5 // pred_check_branch
      %127 = sbr.rel (%p125) target = $region24
    $region23: #{dwconv_forward.1} parent=5 // pred_region
      // Predicated region
      $region25: #{dwconv_forward.1} parent=23 // pred_check
        %p128 = pneg %p29
      $region26: #{dwconv_forward.1} parent=23 // pred_check_branch
        %130 = sbr.rel (%p128) target = $region28
      $region27: #{dwconv_forward.1} parent=23 // pred_region
        %p131 = scmp.lt.s32.totalorder %s9, 1
        %s132 = scalar_select %p131, %s9, 1
        %s133 = smul.addr %s132, 2
        %s134 = smul.addr %s133, 8
        %s135 = scalar_lea.vmem %s0, %s134
      $region28: #{dwconv_forward.1} parent=23 // pred_fallthru
        _
    $region24: #{dwconv_forward.1} parent=5 // pred_fallthru
      _
    %p136 = scmp.le.s32.totalorder 1, %s9
    %p137 = scmp.lt.s32.totalorder %s9, 3
    %p138 = pnand %p136, %p137
    %p139 = pneg %p138
    // Predicated region
    $region29: #{dwconv_forward.1} parent=5 // pred_check
      _
    $region30: #{dwconv_forward.1} parent=5 // pred_check_branch
      %141 = sbr.rel (%p138) target = $region32
    $region31: #{dwconv_forward.1} parent=5 // pred_region
      %s142 = ssub.s32 %s9, 1
      %p143 = scmp.lt.s32.totalorder %s14, 1
      %s144 = scalar_select %p143, %s14, 1
      %s145 = smul.addr %s144, 2
      %s146 = smul.addr %s145, 8
      %s147 = scalar_lea.vmem %s0, %s146
      %p148 = pneg %p35
      %p149 = pneg %p32
      %p150 = pneg %p56
      %p151 = pneg %p53
      %p152 = pneg %p77
      %p153 = pneg %p74
      %p154 = pneg %p103
      %p155 = pneg %p100
      %p156 = scmp.lt.s32.totalorder %s14, 1
      %s157 = scalar_select %p156, %s14, 1
      %s158 = smul.addr %s157, 2
      %s159 = smul.addr %s158, 8
      %s160 = scalar_lea.vmem %s3, %s159
      %p161 = scmp.lt.s32.totalorder %s14, 1
      %s162 = scalar_select %p161, %s14, 1
      %s163 = smul.addr %s162, 2
      %s164 = smul.addr %s163, 8
      %s165 = scalar_lea.vmem %s0, %s164
      %p166 = scmp.lt.s32.totalorder %s14, 1
      %s167 = scalar_select %p166, %s14, 1
      %s168 = smul.addr %s167, 2
      %s169 = smul.addr %s168, 8
      %s170 = scalar_lea.vmem %s3, %s169
      %171 = vst [vmem:[#allocation2] sm:$0xff] 0.0
      %172 = vst [vmem:[#allocation2 + $0x8] sm:$0xff] 0.0
      %173 = vst [vmem:[#allocation2 + $0x10] sm:$0xff] 0.0
      %vm174 = vcmask 277504
      %175 = vst.msk [vmem:[#allocation2 + $0x18] sm:$0xff] %vm174, 0.0
      %176 = vst [vmem:[#allocation2 + $0x20] sm:$0x3] 0.0
      %177 = vst [vmem:[#allocation2 + $0x28] sm:$0x3] 0.0
      %178 = vst [vmem:[#allocation2 + $0x30] sm:$0x3] 0.0
      %vm179 = vcmask 271360
      %180 = vst.msk [vmem:[#allocation2 + $0x38] sm:$0x3] %vm179, 0.0
      %v181 = vld [vmem:[%s165] sm:$0xff]
      %v182 = vld [vmem:[%s165 + $0x8] sm:$0xff]
      %v185 = vrot.slane %v181, 7
      %v186 = vrot.slane %v182, 7
      %189 = vst [vmem:[#allocation2 + $0x8] sm:$0xfe] %v185
      %190 = vst [vmem:[#allocation2 + $0x10] sm:$0xfe] %v186
      %191 = vst [vmem:[#allocation2 + $0x28] sm:$0x1] %v185
      %192 = vst [vmem:[#allocation2 + $0x30] sm:$0x1] %v186
      %v193 = vld [vmem:[%s2] sm:$0x3]
      %v195 = vlaneseq
      %v196 = vshrl.u32 %v195, 7
      %v197 = vsub.s32 0, %v196
      %v198 = vrot.slane %v193, %v197
      %v199 = vlaneseq
      %v200 = vshrl.u32 %v199, 7
      %v201 = vsub.s32 1, %v200
      %v202 = vrot.slane %v193, %v201
      %v205 = vld [vmem:[#allocation2] sm:$0xff]
      %v206 = vld [vmem:[#allocation2 + $0x8] sm:$0xff]
      %v207 = vld [vmem:[#allocation2 + $0x10] sm:$0xff]
      %v208 = vld [vmem:[%s1] ss:$8 sm:$0x3]
      %v210 = vlaneseq
      %v211 = vshrl.u32 %v210, 7
      %v212 = vsub.s32 0, %v211
      %v213 = vrot.slane %v208, %v212
      %v214 = vlaneseq
      %v215 = vshrl.u32 %v214, 7
      %v216 = vsub.s32 1, %v215
      %v217 = vrot.slane %v208, %v216
      %218 = vrot.lane.b32.xlu0 %v213, 95
      %v219 = vpop.permute.xlu0 %218
      %220 = vrot.lane.b32.xlu0 %v217, 95
      %v221 = vpop.permute.xlu0 %220
      %vm222 = vcmask 777216
      %v223 = vsel %vm222, %v219, %v221
      %v227 = vmul.f32 %v205, %v219
      %v228 = vmul.f32 %v206, %v223
      %v229 = vmul.f32 %v207, %v221
      %233 = vrot.lane.b32.xlu0 %v227, 33
      %v234 = vpop.permute.xlu0 %233
      %235 = vrot.lane.b32.xlu0 %v228, 33
      %v236 = vpop.permute.xlu0 %235
      %237 = vrot.lane.b32.xlu0 %v229, 33
      %v238 = vpop.permute.xlu0 %237
      %vm239 = vcmask 269312
      %v240 = vsel %vm239, %v234, %v236
      %v241 = vsel %vm239, %v236, %v238
      %v244 = vadd.f32 %v198, %v240
      %v245 = vadd.f32 %v202, %v241
      %s246 = scalar_lea.vmem %s1, 1
      %v247 = vld [vmem:[%s246] ss:$8 sm:$0x3]
      %v249 = vlaneseq
      %v250 = vshrl.u32 %v249, 7
      %v251 = vsub.s32 0, %v250
      %v252 = vrot.slane %v247, %v251
      %v253 = vlaneseq
      %v254 = vshrl.u32 %v253, 7
      %v255 = vsub.s32 1, %v254
      %v256 = vrot.slane %v247, %v255
      %257 = vrot.lane.b32.xlu0 %v252, 96
      %v258 = vpop.permute.xlu0 %257
      %259 = vrot.lane.b32.xlu0 %v256, 96
      %v260 = vpop.permute.xlu0 %259
      %vm261 = vcmask 785408
      %v262 = vsel %vm261, %v258, %v260
      %v266 = vmul.f32 %v205, %v258
      %v267 = vmul.f32 %v206, %v262
      %v268 = vmul.f32 %v207, %v260
      %272 = vrot.lane.b32.xlu0 %v266, 32
      %v273 = vpop.permute.xlu0 %272
      %274 = vrot.lane.b32.xlu0 %v267, 32
      %v275 = vpop.permute.xlu0 %274
      %276 = vrot.lane.b32.xlu0 %v268, 32
      %v277 = vpop.permute.xlu0 %276
      %vm278 = vcmask 261120
      %v279 = vsel %vm278, %v273, %v275
      %v280 = vsel %vm278, %v275, %v277
      %v283 = vadd.f32 %v244, %v279
      %v284 = vadd.f32 %v245, %v280
      %s285 = scalar_lea.vmem %s1, 2
      %v286 = vld [vmem:[%s285] ss:$8 sm:$0x3]
      %v288 = vlaneseq
      %v289 = vshrl.u32 %v288, 7
      %v290 = vsub.s32 0, %v289
      %v291 = vrot.slane %v286, %v290
      %v292 = vlaneseq
      %v293 = vshrl.u32 %v292, 7
      %v294 = vsub.s32 1, %v293
      %v295 = vrot.slane %v286, %v294
      %296 = vrot.lane.b32.xlu0 %v291, 97
      %v297 = vpop.permute.xlu0 %296
      %298 = vrot.lane.b32.xlu0 %v295, 97
      %v299 = vpop.permute.xlu0 %298
      %vm300 = vcmask 793600
      %v301 = vsel %vm300, %v297, %v299
      %v305 = vmul.f32 %v205, %v297
      %v306 = vmul.f32 %v206, %v301
      %v307 = vmul.f32 %v207, %v299
      %311 = vrot.lane.b32.xlu0 %v305, 31
      %v312 = vpop.permute.xlu0 %311
      %313 = vrot.lane.b32.xlu0 %v306, 31
      %v314 = vpop.permute.xlu0 %313
      %315 = vrot.lane.b32.xlu0 %v307, 31
      %v316 = vpop.permute.xlu0 %315
      %vm317 = vcmask 252928
      %v318 = vsel %vm317, %v312, %v314
      %v319 = vsel %vm317, %v314, %v316
      %v322 = vadd.f32 %v283, %v318
      %v323 = vadd.f32 %v284, %v319
      %s324 = scalar_lea.vmem %s1, 3
      %v325 = vld [vmem:[%s324] ss:$8 sm:$0x3]
      %v327 = vlaneseq
      %v328 = vshrl.u32 %v327, 7
      %v329 = vsub.s32 0, %v328
      %v330 = vrot.slane %v325, %v329
      %v331 = vlaneseq
      %v332 = vshrl.u32 %v331, 7
      %v333 = vsub.s32 1, %v332
      %v334 = vrot.slane %v325, %v333
      %335 = vrot.lane.b32.xlu0 %v330, 127
      %v336 = vpop.permute.xlu0 %335
      %337 = vrot.lane.b32.xlu0 %v334, 127
      %v338 = vpop.permute.xlu0 %337
      %vm339 = vcmask 1039360
      %v340 = vsel %vm339, %v336, %v338
      %v344 = vmul.f32 %v205, %v336
      %v345 = vmul.f32 %v206, %v340
      %v346 = vmul.f32 %v207, %v338
      %350 = vrot.lane.b32.xlu0 %v344, 1
      %v351 = vpop.permute.xlu0 %350
      %352 = vrot.lane.b32.xlu0 %v345, 1
      %v353 = vpop.permute.xlu0 %352
      %354 = vrot.lane.b32.xlu0 %v346, 1
      %v355 = vpop.permute.xlu0 %354
      %vm356 = vcmask 7168
      %v357 = vsel %vm356, %v351, %v353
      %v358 = vsel %vm356, %v353, %v355
      %v361 = vadd.f32 %v322, %v357
      %v362 = vadd.f32 %v323, %v358
      %s363 = scalar_lea.vmem %s1, 4
      %v364 = vld [vmem:[%s363] ss:$8 sm:$0x3]
      %v366 = vlaneseq
      %v367 = vshrl.u32 %v366, 7
      %v368 = vsub.s32 0, %v367
      %v369 = vrot.slane %v364, %v368
      %v370 = vlaneseq
      %v371 = vshrl.u32 %v370, 7
      %v372 = vsub.s32 1, %v371
      %v373 = vrot.slane %v364, %v372
      %v376 = vmul.f32 %v206, %v369
      %v377 = vmul.f32 %v207, %v373
      %v378 = vadd.f32 %v361, %v376
      %v379 = vadd.f32 %v362, %v377
      %v380 = vld [vmem:[#allocation2 + $0x18] sm:$0xff]
      %s381 = scalar_lea.vmem %s1, 5
      %v382 = vld [vmem:[%s381] ss:$8 sm:$0x3]
      %v384 = vlaneseq
      %v385 = vshrl.u32 %v384, 7
      %v386 = vsub.s32 0, %v385
      %v387 = vrot.slane %v382, %v386
      %v388 = vlaneseq
      %v389 = vshrl.u32 %v388, 7
      %v390 = vsub.s32 1, %v389
      %v391 = vrot.slane %v382, %v390
      %392 = vrot.lane.b32.xlu0 %v387, 1
      %v393 = vpop.permute.xlu0 %392
      %394 = vrot.lane.b32.xlu0 %v391, 1
      %v395 = vpop.permute.xlu0 %394
      %v396 = vsel %vm356, %v393, %v395
      %v400 = vmul.f32 %v206, %v393
      %v401 = vmul.f32 %v207, %v396
      %v402 = vmul.f32 %v380, %v395
      %406 = vrot.lane.b32.xlu0 %v400, 127
      %v407 = vpop.permute.xlu0 %406
      %408 = vrot.lane.b32.xlu0 %v401, 127
      %v409 = vpop.permute.xlu0 %408
      %410 = vrot.lane.b32.xlu0 %v402, 127
      %v411 = vpop.permute.xlu0 %410
      %v412 = vsel %vm339, %v407, %v409
      %v413 = vsel %vm339, %v409, %v411
      %v416 = vadd.f32 %v378, %v412
      %v417 = vadd.f32 %v379, %v413
      %s418 = scalar_lea.vmem %s1, 6
      %v419 = vld [vmem:[%s418] ss:$8 sm:$0x3]
      %v421 = vlaneseq
      %v422 = vshrl.u32 %v421, 7
      %v423 = vsub.s32 0, %v422
      %v424 = vrot.slane %v419, %v423
      %v425 = vlaneseq
      %v426 = vshrl.u32 %v425, 7
      %v427 = vsub.s32 1, %v426
      %v428 = vrot.slane %v419, %v427
      %429 = vrot.lane.b32.xlu0 %v424, 31
      %v430 = vpop.permute.xlu0 %429
      %431 = vrot.lane.b32.xlu0 %v428, 31
      %v432 = vpop.permute.xlu0 %431
      %v433 = vsel %vm317, %v430, %v432
      %v437 = vmul.f32 %v206, %v430
      %v438 = vmul.f32 %v207, %v433
      %v439 = vmul.f32 %v380, %v432
      %443 = vrot.lane.b32.xlu0 %v437, 97
      %v444 = vpop.permute.xlu0 %443
      %445 = vrot.lane.b32.xlu0 %v438, 97
      %v446 = vpop.permute.xlu0 %445
      %447 = vrot.lane.b32.xlu0 %v439, 97
      %v448 = vpop.permute.xlu0 %447
      %v449 = vsel %vm300, %v444, %v446
      %v450 = vsel %vm300, %v446, %v448
      %v453 = vadd.f32 %v416, %v449
      %v454 = vadd.f32 %v417, %v450
      %s455 = scalar_lea.vmem %s1, 7
      %v456 = vld [vmem:[%s455] ss:$8 sm:$0x3]
      %v458 = vlaneseq
      %v459 = vshrl.u32 %v458, 7
      %v460 = vsub.s32 0, %v459
      %v461 = vrot.slane %v456, %v460
      %v462 = vlaneseq
      %v463 = vshrl.u32 %v462, 7
      %v464 = vsub.s32 1, %v463
      %v465 = vrot.slane %v456, %v464
      %466 = vrot.lane.b32.xlu0 %v461, 32
      %v467 = vpop.permute.xlu0 %466
      %468 = vrot.lane.b32.xlu0 %v465, 32
      %v469 = vpop.permute.xlu0 %468
      %v470 = vsel %vm278, %v467, %v469
      %v474 = vmul.f32 %v206, %v467
      %v475 = vmul.f32 %v207, %v470
      %v476 = vmul.f32 %v380, %v469
      %480 = vrot.lane.b32.xlu0 %v474, 96
      %v481 = vpop.permute.xlu0 %480
      %482 = vrot.lane.b32.xlu0 %v475, 96
      %v483 = vpop.permute.xlu0 %482
      %484 = vrot.lane.b32.xlu0 %v476, 96
      %v485 = vpop.permute.xlu0 %484
      %v486 = vsel %vm261, %v481, %v483
      %v487 = vsel %vm261, %v483, %v485
      %v490 = vadd.f32 %v453, %v486
      %v491 = vadd.f32 %v454, %v487
      %s492 = scalar_lea.vmem %s1, 16
      %v493 = vld [vmem:[%s492] ss:$8 sm:$0x3]
      %v495 = vlaneseq
      %v496 = vshrl.u32 %v495, 7
      %v497 = vsub.s32 0, %v496
      %v498 = vrot.slane %v493, %v497
      %v499 = vlaneseq
      %v500 = vshrl.u32 %v499, 7
      %v501 = vsub.s32 1, %v500
      %v502 = vrot.slane %v493, %v501
      %503 = vrot.lane.b32.xlu0 %v498, 33
      %v504 = vpop.permute.xlu0 %503
      %505 = vrot.lane.b32.xlu0 %v502, 33
      %v506 = vpop.permute.xlu0 %505
      %v507 = vsel %vm239, %v504, %v506
      %v511 = vmul.f32 %v206, %v504
      %v512 = vmul.f32 %v207, %v507
      %v513 = vmul.f32 %v380, %v506
      %517 = vrot.lane.b32.xlu0 %v511, 95
      %v518 = vpop.permute.xlu0 %517
      %519 = vrot.lane.b32.xlu0 %v512, 95
      %v520 = vpop.permute.xlu0 %519
      %521 = vrot.lane.b32.xlu0 %v513, 95
      %v522 = vpop.permute.xlu0 %521
      %v523 = vsel %vm222, %v518, %v520
      %v524 = vsel %vm222, %v520, %v522
      %v527 = vadd.f32 %v490, %v523
      %v528 = vadd.f32 %v491, %v524
      %v529 = vld [vmem:[#allocation2] sm:$0xfe]
      %v530 = vld [vmem:[#allocation2 + $0x8] sm:$0xfe]
      %v531 = vld [vmem:[#allocation2 + $0x10] sm:$0xfe]
      %v532 = vld [vmem:[#allocation2 + $0x20] sm:$0x1]
      %v533 = vld [vmem:[#allocation2 + $0x28] sm:$0x1]
      %v534 = vld [vmem:[#allocation2 + $0x30] sm:$0x1]
      %s535 = scalar_lea.vmem %s1, 17
      %v536 = vld [vmem:[%s535] ss:$8 sm:$0x3]
      %v538 = vlaneseq
      %v539 = vshrl.u32 %v538, 7
      %v540 = vsub.s32 0, %v539
      %v541 = vrot.slane %v536, %v540
      %v542 = vlaneseq
      %v543 = vshrl.u32 %v542, 7
      %v544 = vsub.s32 1, %v543
      %v545 = vrot.slane %v536, %v544
      %546 = vrot.lane.b32.xlu0 %v541, 95
      %v547 = vpop.permute.xlu0 %546
      %548 = vrot.lane.b32.xlu0 %v545, 95
      %v549 = vpop.permute.xlu0 %548
      %v550 = vsel %vm222, %v547, %v549
      %v554 = vmul.f32 %v529, %v547
      %v555 = vmul.f32 %v530, %v550
      %v556 = vmul.f32 %v531, %v549
      %v557 = vmul.f32 %v532, %v547
      %v558 = vmul.f32 %v533, %v550
      %v559 = vmul.f32 %v534, %v549
      %vm566 = vcmask 1046528
      %v567 = vrot.slane %v554, 1
      %v568 = vrot.slane %v557, 1
      %v569 = vsel %vm566, %v567, %v568
      %v570 = vrot.slane %v555, 1
      %v571 = vrot.slane %v558, 1
      %v572 = vsel %vm566, %v570, %v571
      %v573 = vrot.slane %v556, 1
      %v574 = vrot.slane %v559, 1
      %v575 = vsel %vm566, %v573, %v574
      %576 = vrot.lane.b32.xlu0 %v569, 33
      %v577 = vpop.permute.xlu0 %576
      %578 = vrot.lane.b32.xlu0 %v572, 33
      %v579 = vpop.permute.xlu0 %578
      %580 = vrot.lane.b32.xlu0 %v575, 33
      %v581 = vpop.permute.xlu0 %580
      %v582 = vsel %vm239, %v577, %v579
      %v583 = vsel %vm239, %v579, %v581
      %v586 = vadd.f32 %v527, %v582
      %v587 = vadd.f32 %v528, %v583
      %s588 = scalar_lea.vmem %s1, 18
      %v589 = vld [vmem:[%s588] ss:$8 sm:$0x3]
      %v591 = vlaneseq
      %v592 = vshrl.u32 %v591, 7
      %v593 = vsub.s32 0, %v592
      %v594 = vrot.slane %v589, %v593
      %v595 = vlaneseq
      %v596 = vshrl.u32 %v595, 7
      %v597 = vsub.s32 1, %v596
      %v598 = vrot.slane %v589, %v597
      %599 = vrot.lane.b32.xlu0 %v594, 96
      %v600 = vpop.permute.xlu0 %599
      %601 = vrot.lane.b32.xlu0 %v598, 96
      %v602 = vpop.permute.xlu0 %601
      %v603 = vsel %vm261, %v600, %v602
      %v607 = vmul.f32 %v529, %v600
      %v608 = vmul.f32 %v530, %v603
      %v609 = vmul.f32 %v531, %v602
      %v610 = vmul.f32 %v532, %v600
      %v611 = vmul.f32 %v533, %v603
      %v612 = vmul.f32 %v534, %v602
      %v619 = vrot.slane %v607, 1
      %v620 = vrot.slane %v610, 1
      %v621 = vsel %vm566, %v619, %v620
      %v622 = vrot.slane %v608, 1
      %v623 = vrot.slane %v611, 1
      %v624 = vsel %vm566, %v622, %v623
      %v625 = vrot.slane %v609, 1
      %v626 = vrot.slane %v612, 1
      %v627 = vsel %vm566, %v625, %v626
      %628 = vrot.lane.b32.xlu0 %v621, 32
      %v629 = vpop.permute.xlu0 %628
      %630 = vrot.lane.b32.xlu0 %v624, 32
      %v631 = vpop.permute.xlu0 %630
      %632 = vrot.lane.b32.xlu0 %v627, 32
      %v633 = vpop.permute.xlu0 %632
      %v634 = vsel %vm278, %v629, %v631
      %v635 = vsel %vm278, %v631, %v633
      %v638 = vadd.f32 %v586, %v634
      %v639 = vadd.f32 %v587, %v635
      %s640 = scalar_lea.vmem %s1, 19
      %v641 = vld [vmem:[%s640] ss:$8 sm:$0x3]
      %v643 = vlaneseq
      %v644 = vshrl.u32 %v643, 7
      %v645 = vsub.s32 0, %v644
      %v646 = vrot.slane %v641, %v645
      %v647 = vlaneseq
      %v648 = vshrl.u32 %v647, 7
      %v649 = vsub.s32 1, %v648
      %v650 = vrot.slane %v641, %v649
      %651 = vrot.lane.b32.xlu0 %v646, 97
      %v652 = vpop.permute.xlu0 %651
      %653 = vrot.lane.b32.xlu0 %v650, 97
      %v654 = vpop.permute.xlu0 %653
      %v655 = vsel %vm300, %v652, %v654
      %v659 = vmul.f32 %v529, %v652
      %v660 = vmul.f32 %v530, %v655
      %v661 = vmul.f32 %v531, %v654
      %v662 = vmul.f32 %v532, %v652
      %v663 = vmul.f32 %v533, %v655
      %v664 = vmul.f32 %v534, %v654
      %v671 = vrot.slane %v659, 1
      %v672 = vrot.slane %v662, 1
      %v673 = vsel %vm566, %v671, %v672
      %v674 = vrot.slane %v660, 1
      %v675 = vrot.slane %v663, 1
      %v676 = vsel %vm566, %v674, %v675
      %v677 = vrot.slane %v661, 1
      %v678 = vrot.slane %v664, 1
      %v679 = vsel %vm566, %v677, %v678
      %680 = vrot.lane.b32.xlu0 %v673, 31
      %v681 = vpop.permute.xlu0 %680
      %682 = vrot.lane.b32.xlu0 %v676, 31
      %v683 = vpop.permute.xlu0 %682
      %684 = vrot.lane.b32.xlu0 %v679, 31
      %v685 = vpop.permute.xlu0 %684
      %v686 = vsel %vm317, %v681, %v683
      %v687 = vsel %vm317, %v683, %v685
      %v690 = vadd.f32 %v638, %v686
      %v691 = vadd.f32 %v639, %v687
      %s692 = scalar_lea.vmem %s1, 20
      %v693 = vld [vmem:[%s692] ss:$8 sm:$0x3]
      %v695 = vlaneseq
      %v696 = vshrl.u32 %v695, 7
      %v697 = vsub.s32 0, %v696
      %v698 = vrot.slane %v693, %v697
      %v699 = vlaneseq
      %v700 = vshrl.u32 %v699, 7
      %v701 = vsub.s32 1, %v700
      %v702 = vrot.slane %v693, %v701
      %703 = vrot.lane.b32.xlu0 %v698, 127
      %v704 = vpop.permute.xlu0 %703
      %705 = vrot.lane.b32.xlu0 %v702, 127
      %v706 = vpop.permute.xlu0 %705
      %v707 = vsel %vm339, %v704, %v706
      %v711 = vmul.f32 %v529, %v704
      %v712 = vmul.f32 %v530, %v707
      %v713 = vmul.f32 %v531, %v706
      %v714 = vmul.f32 %v532, %v704
      %v715 = vmul.f32 %v533, %v707
      %v716 = vmul.f32 %v534, %v706
      %v723 = vrot.slane %v711, 1
      %v724 = vrot.slane %v714, 1
      %v725 = vsel %vm566, %v723, %v724
      %v726 = vrot.slane %v712, 1
      %v727 = vrot.slane %v715, 1
      %v728 = vsel %vm566, %v726, %v727
      %v729 = vrot.slane %v713, 1
      %v730 = vrot.slane %v716, 1
      %v731 = vsel %vm566, %v729, %v730
      %732 = vrot.lane.b32.xlu0 %v725, 1
      %v733 = vpop.permute.xlu0 %732
      %734 = vrot.lane.b32.xlu0 %v728, 1
      %v735 = vpop.permute.xlu0 %734
      %736 = vrot.lane.b32.xlu0 %v731, 1
      %v737 = vpop.permute.xlu0 %736
      %v738 = vsel %vm356, %v733, %v735
      %v739 = vsel %vm356, %v735, %v737
      %v742 = vadd.f32 %v690, %v738
      %v743 = vadd.f32 %v691, %v739
      %s744 = scalar_lea.vmem %s1, 21
      %v745 = vld [vmem:[%s744] ss:$8 sm:$0x3]
      %v747 = vlaneseq
      %v748 = vshrl.u32 %v747, 7
      %v749 = vsub.s32 0, %v748
      %v750 = vrot.slane %v745, %v749
      %v751 = vlaneseq
      %v752 = vshrl.u32 %v751, 7
      %v753 = vsub.s32 1, %v752
      %v754 = vrot.slane %v745, %v753
      %v757 = vmul.f32 %v530, %v750
      %v758 = vmul.f32 %v531, %v754
      %v759 = vmul.f32 %v533, %v750
      %v760 = vmul.f32 %v534, %v754
      %v765 = vrot.slane %v757, 1
      %v766 = vrot.slane %v759, 1
      %v767 = vsel %vm566, %v765, %v766
      %v768 = vrot.slane %v758, 1
      %v769 = vrot.slane %v760, 1
      %v770 = vsel %vm566, %v768, %v769
      %v773 = vadd.f32 %v742, %v767
      %v774 = vadd.f32 %v743, %v770
      %v775 = vld [vmem:[#allocation2 + $0x18] sm:$0xfe]
      %v776 = vld [vmem:[#allocation2 + $0x38] sm:$0x1]
      %s777 = scalar_lea.vmem %s1, 22
      %v778 = vld [vmem:[%s777] ss:$8 sm:$0x3]
      %v780 = vlaneseq
      %v781 = vshrl.u32 %v780, 7
      %v782 = vsub.s32 0, %v781
      %v783 = vrot.slane %v778, %v782
      %v784 = vlaneseq
      %v785 = vshrl.u32 %v784, 7
      %v786 = vsub.s32 1, %v785
      %v787 = vrot.slane %v778, %v786
      %788 = vrot.lane.b32.xlu0 %v783, 1
      %v789 = vpop.permute.xlu0 %788
      %790 = vrot.lane.b32.xlu0 %v787, 1
      %v791 = vpop.permute.xlu0 %790
      %v792 = vsel %vm356, %v789, %v791
      %v796 = vmul.f32 %v530, %v789
      %v797 = vmul.f32 %v531, %v792
      %v798 = vmul.f32 %v775, %v791
      %v799 = vmul.f32 %v533, %v789
      %v800 = vmul.f32 %v534, %v792
      %v801 = vmul.f32 %v776, %v791
      %v808 = vrot.slane %v796, 1
      %v809 = vrot.slane %v799, 1
      %v810 = vsel %vm566, %v808, %v809
      %v811 = vrot.slane %v797, 1
      %v812 = vrot.slane %v800, 1
      %v813 = vsel %vm566, %v811, %v812
      %v814 = vrot.slane %v798, 1
      %v815 = vrot.slane %v801, 1
      %v816 = vsel %vm566, %v814, %v815
      %817 = vrot.lane.b32.xlu0 %v810, 127
      %v818 = vpop.permute.xlu0 %817
      %819 = vrot.lane.b32.xlu0 %v813, 127
      %v820 = vpop.permute.xlu0 %819
      %821 = vrot.lane.b32.xlu0 %v816, 127
      %v822 = vpop.permute.xlu0 %821
      %v823 = vsel %vm339, %v818, %v820
      %v824 = vsel %vm339, %v820, %v822
      %v827 = vadd.f32 %v773, %v823
      %v828 = vadd.f32 %v774, %v824
      %s829 = scalar_lea.vmem %s1, 23
      %v830 = vld [vmem:[%s829] ss:$8 sm:$0x3]
      %v832 = vlaneseq
      %v833 = vshrl.u32 %v832, 7
      %v834 = vsub.s32 0, %v833
      %v835 = vrot.slane %v830, %v834
      %v836 = vlaneseq
      %v837 = vshrl.u32 %v836, 7
      %v838 = vsub.s32 1, %v837
      %v839 = vrot.slane %v830, %v838
      %840 = vrot.lane.b32.xlu0 %v835, 31
      %v841 = vpop.permute.xlu0 %840
      %842 = vrot.lane.b32.xlu0 %v839, 31
      %v843 = vpop.permute.xlu0 %842
      %v844 = vsel %vm317, %v841, %v843
      %v848 = vmul.f32 %v530, %v841
      %v849 = vmul.f32 %v531, %v844
      %v850 = vmul.f32 %v775, %v843
      %v851 = vmul.f32 %v533, %v841
      %v852 = vmul.f32 %v534, %v844
      %v853 = vmul.f32 %v776, %v843
      %v860 = vrot.slane %v848, 1
      %v861 = vrot.slane %v851, 1
      %v862 = vsel %vm566, %v860, %v861
      %v863 = vrot.slane %v849, 1
      %v864 = vrot.slane %v852, 1
      %v865 = vsel %vm566, %v863, %v864
      %v866 = vrot.slane %v850, 1
      %v867 = vrot.slane %v853, 1
      %v868 = vsel %vm566, %v866, %v867
      %869 = vrot.lane.b32.xlu0 %v862, 97
      %v870 = vpop.permute.xlu0 %869
      %871 = vrot.lane.b32.xlu0 %v865, 97
      %v872 = vpop.permute.xlu0 %871
      %873 = vrot.lane.b32.xlu0 %v868, 97
      %v874 = vpop.permute.xlu0 %873
      %v875 = vsel %vm300, %v870, %v872
      %v876 = vsel %vm300, %v872, %v874
      %v879 = vadd.f32 %v827, %v875
      %v880 = vadd.f32 %v828, %v876
      %s881 = scalar_lea.vmem %s1, 32
      %v882 = vld [vmem:[%s881] ss:$8 sm:$0x3]
      %v884 = vlaneseq
      %v885 = vshrl.u32 %v884, 7
      %v886 = vsub.s32 0, %v885
      %v887 = vrot.slane %v882, %v886
      %v888 = vlaneseq
      %v889 = vshrl.u32 %v888, 7
      %v890 = vsub.s32 1, %v889
      %v891 = vrot.slane %v882, %v890
      %892 = vrot.lane.b32.xlu0 %v887, 32
      %v893 = vpop.permute.xlu0 %892
      %894 = vrot.lane.b32.xlu0 %v891, 32
      %v895 = vpop.permute.xlu0 %894
      %v896 = vsel %vm278, %v893, %v895
      %v900 = vmul.f32 %v530, %v893
      %v901 = vmul.f32 %v531, %v896
      %v902 = vmul.f32 %v775, %v895
      %v903 = vmul.f32 %v533, %v893
      %v904 = vmul.f32 %v534, %v896
      %v905 = vmul.f32 %v776, %v895
      %v912 = vrot.slane %v900, 1
      %v913 = vrot.slane %v903, 1
      %v914 = vsel %vm566, %v912, %v913
      %v915 = vrot.slane %v901, 1
      %v916 = vrot.slane %v904, 1
      %v917 = vsel %vm566, %v915, %v916
      %v918 = vrot.slane %v902, 1
      %v919 = vrot.slane %v905, 1
      %v920 = vsel %vm566, %v918, %v919
      %921 = vrot.lane.b32.xlu0 %v914, 96
      %v922 = vpop.permute.xlu0 %921
      %923 = vrot.lane.b32.xlu0 %v917, 96
      %v924 = vpop.permute.xlu0 %923
      %925 = vrot.lane.b32.xlu0 %v920, 96
      %v926 = vpop.permute.xlu0 %925
      %v927 = vsel %vm261, %v922, %v924
      %v928 = vsel %vm261, %v924, %v926
      %v931 = vadd.f32 %v879, %v927
      %v932 = vadd.f32 %v880, %v928
      %s933 = scalar_lea.vmem %s1, 33
      %v934 = vld [vmem:[%s933] ss:$8 sm:$0x3]
      %v936 = vlaneseq
      %v937 = vshrl.u32 %v936, 7
      %v938 = vsub.s32 0, %v937
      %v939 = vrot.slane %v934, %v938
      %v940 = vlaneseq
      %v941 = vshrl.u32 %v940, 7
      %v942 = vsub.s32 1, %v941
      %v943 = vrot.slane %v934, %v942
      %944 = vrot.lane.b32.xlu0 %v939, 33
      %v945 = vpop.permute.xlu0 %944
      %946 = vrot.lane.b32.xlu0 %v943, 33
      %v947 = vpop.permute.xlu0 %946
      %v948 = vsel %vm239, %v945, %v947
      %v952 = vmul.f32 %v530, %v945
      %v953 = vmul.f32 %v531, %v948
      %v954 = vmul.f32 %v775, %v947
      %v955 = vmul.f32 %v533, %v945
      %v956 = vmul.f32 %v534, %v948
      %v957 = vmul.f32 %v776, %v947
      %v964 = vrot.slane %v952, 1
      %v965 = vrot.slane %v955, 1
      %v966 = vsel %vm566, %v964, %v965
      %v967 = vrot.slane %v953, 1
      %v968 = vrot.slane %v956, 1
      %v969 = vsel %vm566, %v967, %v968
      %v970 = vrot.slane %v954, 1
      %v971 = vrot.slane %v957, 1
      %v972 = vsel %vm566, %v970, %v971
      %973 = vrot.lane.b32.xlu0 %v966, 95
      %v974 = vpop.permute.xlu0 %973
      %975 = vrot.lane.b32.xlu0 %v969, 95
      %v976 = vpop.permute.xlu0 %975
      %977 = vrot.lane.b32.xlu0 %v972, 95
      %v978 = vpop.permute.xlu0 %977
      %v979 = vsel %vm222, %v974, %v976
      %v980 = vsel %vm222, %v976, %v978
      %v983 = vadd.f32 %v931, %v979
      %v984 = vadd.f32 %v932, %v980
      %v985 = vld [vmem:[#allocation2] sm:$0xfc]
      %v986 = vld [vmem:[#allocation2 + $0x8] sm:$0xfc]
      %v987 = vld [vmem:[#allocation2 + $0x10] sm:$0xfc]
      %v988 = vld [vmem:[#allocation2 + $0x20] sm:$0x3]
      %v989 = vld [vmem:[#allocation2 + $0x28] sm:$0x3]
      %v990 = vld [vmem:[#allocation2 + $0x30] sm:$0x3]
      %s991 = scalar_lea.vmem %s1, 34
      %v992 = vld [vmem:[%s991] ss:$8 sm:$0x3]
      %v994 = vlaneseq
      %v995 = vshrl.u32 %v994, 7
      %v996 = vsub.s32 0, %v995
      %v997 = vrot.slane %v992, %v996
      %v998 = vlaneseq
      %v999 = vshrl.u32 %v998, 7
      %v1000 = vsub.s32 1, %v999
      %v1001 = vrot.slane %v992, %v1000
      %1002 = vrot.lane.b32.xlu0 %v997, 95
      %v1003 = vpop.permute.xlu0 %1002
      %1004 = vrot.lane.b32.xlu0 %v1001, 95
      %v1005 = vpop.permute.xlu0 %1004
      %v1006 = vsel %vm222, %v1003, %v1005
      %v1010 = vmul.f32 %v985, %v1003
      %v1011 = vmul.f32 %v986, %v1006
      %v1012 = vmul.f32 %v987, %v1005
      %v1013 = vmul.f32 %v988, %v1003
      %v1014 = vmul.f32 %v989, %v1006
      %v1015 = vmul.f32 %v990, %v1005
      %vm1022 = vcmask 1045504
      %v1023 = vrot.slane %v1010, 2
      %v1024 = vrot.slane %v1013, 2
      %v1025 = vsel %vm1022, %v1023, %v1024
      %v1026 = vrot.slane %v1011, 2
      %v1027 = vrot.slane %v1014, 2
      %v1028 = vsel %vm1022, %v1026, %v1027
      %v1029 = vrot.slane %v1012, 2
      %v1030 = vrot.slane %v1015, 2
      %v1031 = vsel %vm1022, %v1029, %v1030
      %1032 = vrot.lane.b32.xlu0 %v1025, 33
      %v1033 = vpop.permute.xlu0 %1032
      %1034 = vrot.lane.b32.xlu0 %v1028, 33
      %v1035 = vpop.permute.xlu0 %1034
      %1036 = vrot.lane.b32.xlu0 %v1031, 33
      %v1037 = vpop.permute.xlu0 %1036
      %v1038 = vsel %vm239, %v1033, %v1035
      %v1039 = vsel %vm239, %v1035, %v1037
      %v1042 = vadd.f32 %v983, %v1038
      %v1043 = vadd.f32 %v984, %v1039
      %s1044 = scalar_lea.vmem %s1, 35
      %v1045 = vld [vmem:[%s1044] ss:$8 sm:$0x3]
      %v1047 = vlaneseq
      %v1048 = vshrl.u32 %v1047, 7
      %v1049 = vsub.s32 0, %v1048
      %v1050 = vrot.slane %v1045, %v1049
      %v1051 = vlaneseq
      %v1052 = vshrl.u32 %v1051, 7
      %v1053 = vsub.s32 1, %v1052
      %v1054 = vrot.slane %v1045, %v1053
      %1055 = vrot.lane.b32.xlu0 %v1050, 96
      %v1056 = vpop.permute.xlu0 %1055
      %1057 = vrot.lane.b32.xlu0 %v1054, 96
      %v1058 = vpop.permute.xlu0 %1057
      %v1059 = vsel %vm261, %v1056, %v1058
      %v1063 = vmul.f32 %v985, %v1056
      %v1064 = vmul.f32 %v986, %v1059
      %v1065 = vmul.f32 %v987, %v1058
      %v1066 = vmul.f32 %v988, %v1056
      %v1067 = vmul.f32 %v989, %v1059
      %v1068 = vmul.f32 %v990, %v1058
      %v1075 = vrot.slane %v1063, 2
      %v1076 = vrot.slane %v1066, 2
      %v1077 = vsel %vm1022, %v1075, %v1076
      %v1078 = vrot.slane %v1064, 2
      %v1079 = vrot.slane %v1067, 2
      %v1080 = vsel %vm1022, %v1078, %v1079
      %v1081 = vrot.slane %v1065, 2
      %v1082 = vrot.slane %v1068, 2
      %v1083 = vsel %vm1022, %v1081, %v1082
      %1084 = vrot.lane.b32.xlu0 %v1077, 32
      %v1085 = vpop.permute.xlu0 %1084
      %1086 = vrot.lane.b32.xlu0 %v1080, 32
      %v1087 = vpop.permute.xlu0 %1086
      %1088 = vrot.lane.b32.xlu0 %v1083, 32
      %v1089 = vpop.permute.xlu0 %1088
      %v1090 = vsel %vm278, %v1085, %v1087
      %v1091 = vsel %vm278, %v1087, %v1089
      %v1094 = vadd.f32 %v1042, %v1090
      %v1095 = vadd.f32 %v1043, %v1091
      %s1096 = scalar_lea.vmem %s1, 36
      %v1097 = vld [vmem:[%s1096] ss:$8 sm:$0x3]
      %v1099 = vlaneseq
      %v1100 = vshrl.u32 %v1099, 7
      %v1101 = vsub.s32 0, %v1100
      %v1102 = vrot.slane %v1097, %v1101
      %v1103 = vlaneseq
      %v1104 = vshrl.u32 %v1103, 7
      %v1105 = vsub.s32 1, %v1104
      %v1106 = vrot.slane %v1097, %v1105
      %1107 = vrot.lane.b32.xlu0 %v1102, 97
      %v1108 = vpop.permute.xlu0 %1107
      %1109 = vrot.lane.b32.xlu0 %v1106, 97
      %v1110 = vpop.permute.xlu0 %1109
      %v1111 = vsel %vm300, %v1108, %v1110
      %v1115 = vmul.f32 %v985, %v1108
      %v1116 = vmul.f32 %v986, %v1111
      %v1117 = vmul.f32 %v987, %v1110
      %v1118 = vmul.f32 %v988, %v1108
      %v1119 = vmul.f32 %v989, %v1111
      %v1120 = vmul.f32 %v990, %v1110
      %v1127 = vrot.slane %v1115, 2
      %v1128 = vrot.slane %v1118, 2
      %v1129 = vsel %vm1022, %v1127, %v1128
      %v1130 = vrot.slane %v1116, 2
      %v1131 = vrot.slane %v1119, 2
      %v1132 = vsel %vm1022, %v1130, %v1131
      %v1133 = vrot.slane %v1117, 2
      %v1134 = vrot.slane %v1120, 2
      %v1135 = vsel %vm1022, %v1133, %v1134
      %1136 = vrot.lane.b32.xlu0 %v1129, 31
      %v1137 = vpop.permute.xlu0 %1136
      %1138 = vrot.lane.b32.xlu0 %v1132, 31
      %v1139 = vpop.permute.xlu0 %1138
      %1140 = vrot.lane.b32.xlu0 %v1135, 31
      %v1141 = vpop.permute.xlu0 %1140
      %v1142 = vsel %vm317, %v1137, %v1139
      %v1143 = vsel %vm317, %v1139, %v1141
      %v1146 = vadd.f32 %v1094, %v1142
      %v1147 = vadd.f32 %v1095, %v1143
      %s1148 = scalar_lea.vmem %s1, 37
      %v1149 = vld [vmem:[%s1148] ss:$8 sm:$0x3]
      %v1151 = vlaneseq
      %v1152 = vshrl.u32 %v1151, 7
      %v1153 = vsub.s32 0, %v1152
      %v1154 = vrot.slane %v1149, %v1153
      %v1155 = vlaneseq
      %v1156 = vshrl.u32 %v1155, 7
      %v1157 = vsub.s32 1, %v1156
      %v1158 = vrot.slane %v1149, %v1157
      %1159 = vrot.lane.b32.xlu0 %v1154, 127
      %v1160 = vpop.permute.xlu0 %1159
      %1161 = vrot.lane.b32.xlu0 %v1158, 127
      %v1162 = vpop.permute.xlu0 %1161
      %v1163 = vsel %vm339, %v1160, %v1162
      %v1167 = vmul.f32 %v985, %v1160
      %v1168 = vmul.f32 %v986, %v1163
      %v1169 = vmul.f32 %v987, %v1162
      %v1170 = vmul.f32 %v988, %v1160
      %v1171 = vmul.f32 %v989, %v1163
      %v1172 = vmul.f32 %v990, %v1162
      %v1179 = vrot.slane %v1167, 2
      %v1180 = vrot.slane %v1170, 2
      %v1181 = vsel %vm1022, %v1179, %v1180
      %v1182 = vrot.slane %v1168, 2
      %v1183 = vrot.slane %v1171, 2
      %v1184 = vsel %vm1022, %v1182, %v1183
      %v1185 = vrot.slane %v1169, 2
      %v1186 = vrot.slane %v1172, 2
      %v1187 = vsel %vm1022, %v1185, %v1186
      %1188 = vrot.lane.b32.xlu0 %v1181, 1
      %v1189 = vpop.permute.xlu0 %1188
      %1190 = vrot.lane.b32.xlu0 %v1184, 1
      %v1191 = vpop.permute.xlu0 %1190
      %1192 = vrot.lane.b32.xlu0 %v1187, 1
      %v1193 = vpop.permute.xlu0 %1192
      %v1194 = vsel %vm356, %v1189, %v1191
      %v1195 = vsel %vm356, %v1191, %v1193
      %v1198 = vadd.f32 %v1146, %v1194
      %v1199 = vadd.f32 %v1147, %v1195
      %s1200 = scalar_lea.vmem %s1, 38
      %v1201 = vld [vmem:[%s1200] ss:$8 sm:$0x3]
      %v1203 = vlaneseq
      %v1204 = vshrl.u32 %v1203, 7
      %v1205 = vsub.s32 0, %v1204
      %v1206 = vrot.slane %v1201, %v1205
      %v1207 = vlaneseq
      %v1208 = vshrl.u32 %v1207, 7
      %v1209 = vsub.s32 1, %v1208
      %v1210 = vrot.slane %v1201, %v1209
      %v1213 = vmul.f32 %v986, %v1206
      %v1214 = vmul.f32 %v987, %v1210
      %v1215 = vmul.f32 %v989, %v1206
      %v1216 = vmul.f32 %v990, %v1210
      %v1221 = vrot.slane %v1213, 2
      %v1222 = vrot.slane %v1215, 2
      %v1223 = vsel %vm1022, %v1221, %v1222
      %v1224 = vrot.slane %v1214, 2
      %v1225 = vrot.slane %v1216, 2
      %v1226 = vsel %vm1022, %v1224, %v1225
      %v1229 = vadd.f32 %v1198, %v1223
      %v1230 = vadd.f32 %v1199, %v1226
      %v1231 = vld [vmem:[#allocation2 + $0x18] sm:$0xfc]
      %v1232 = vld [vmem:[#allocation2 + $0x38] sm:$0x3]
      %s1233 = scalar_lea.vmem %s1, 39
      %v1234 = vld [vmem:[%s1233] ss:$8 sm:$0x3]
      %v1236 = vlaneseq
      %v1237 = vshrl.u32 %v1236, 7
      %v1238 = vsub.s32 0, %v1237
      %v1239 = vrot.slane %v1234, %v1238
      %v1240 = vlaneseq
      %v1241 = vshrl.u32 %v1240, 7
      %v1242 = vsub.s32 1, %v1241
      %v1243 = vrot.slane %v1234, %v1242
      %1244 = vrot.lane.b32.xlu0 %v1239, 1
      %v1245 = vpop.permute.xlu0 %1244
      %1246 = vrot.lane.b32.xlu0 %v1243, 1
      %v1247 = vpop.permute.xlu0 %1246
      %v1248 = vsel %vm356, %v1245, %v1247
      %v1252 = vmul.f32 %v986, %v1245
      %v1253 = vmul.f32 %v987, %v1248
      %v1254 = vmul.f32 %v1231, %v1247
      %v1255 = vmul.f32 %v989, %v1245
      %v1256 = vmul.f32 %v990, %v1248
      %v1257 = vmul.f32 %v1232, %v1247
      %v1264 = vrot.slane %v1252, 2
      %v1265 = vrot.slane %v1255, 2
      %v1266 = vsel %vm1022, %v1264, %v1265
      %v1267 = vrot.slane %v1253, 2
      %v1268 = vrot.slane %v1256, 2
      %v1269 = vsel %vm1022, %v1267, %v1268
      %v1270 = vrot.slane %v1254, 2
      %v1271 = vrot.slane %v1257, 2
      %v1272 = vsel %vm1022, %v1270, %v1271
      %1273 = vrot.lane.b32.xlu0 %v1266, 127
      %v1274 = vpop.permute.xlu0 %1273
      %1275 = vrot.lane.b32.xlu0 %v1269, 127
      %v1276 = vpop.permute.xlu0 %1275
      %1277 = vrot.lane.b32.xlu0 %v1272, 127
      %v1278 = vpop.permute.xlu0 %1277
      %v1279 = vsel %vm339, %v1274, %v1276
      %v1280 = vsel %vm339, %v1276, %v1278
      %v1283 = vadd.f32 %v1229, %v1279
      %v1284 = vadd.f32 %v1230, %v1280
      %s1285 = scalar_lea.vmem %s1, 48
      %v1286 = vld [vmem:[%s1285] ss:$8 sm:$0x3]
      %v1288 = vlaneseq
      %v1289 = vshrl.u32 %v1288, 7
      %v1290 = vsub.s32 0, %v1289
      %v1291 = vrot.slane %v1286, %v1290
      %v1292 = vlaneseq
      %v1293 = vshrl.u32 %v1292, 7
      %v1294 = vsub.s32 1, %v1293
      %v1295 = vrot.slane %v1286, %v1294
      %1296 = vrot.lane.b32.xlu0 %v1291, 31
      %v1297 = vpop.permute.xlu0 %1296
      %1298 = vrot.lane.b32.xlu0 %v1295, 31
      %v1299 = vpop.permute.xlu0 %1298
      %v1300 = vsel %vm317, %v1297, %v1299
      %v1304 = vmul.f32 %v986, %v1297
      %v1305 = vmul.f32 %v987, %v1300
      %v1306 = vmul.f32 %v1231, %v1299
      %v1307 = vmul.f32 %v989, %v1297
      %v1308 = vmul.f32 %v990, %v1300
      %v1309 = vmul.f32 %v1232, %v1299
      %v1316 = vrot.slane %v1304, 2
      %v1317 = vrot.slane %v1307, 2
      %v1318 = vsel %vm1022, %v1316, %v1317
      %v1319 = vrot.slane %v1305, 2
      %v1320 = vrot.slane %v1308, 2
      %v1321 = vsel %vm1022, %v1319, %v1320
      %v1322 = vrot.slane %v1306, 2
      %v1323 = vrot.slane %v1309, 2
      %v1324 = vsel %vm1022, %v1322, %v1323
      %1325 = vrot.lane.b32.xlu0 %v1318, 97
      %v1326 = vpop.permute.xlu0 %1325
      %1327 = vrot.lane.b32.xlu0 %v1321, 97
      %v1328 = vpop.permute.xlu0 %1327
      %1329 = vrot.lane.b32.xlu0 %v1324, 97
      %v1330 = vpop.permute.xlu0 %1329
      %v1331 = vsel %vm300, %v1326, %v1328
      %v1332 = vsel %vm300, %v1328, %v1330
      %v1335 = vadd.f32 %v1283, %v1331
      %v1336 = vadd.f32 %v1284, %v1332
      %s1337 = scalar_lea.vmem %s1, 49
      %v1338 = vld [vmem:[%s1337] ss:$8 sm:$0x3]
      %v1340 = vlaneseq
      %v1341 = vshrl.u32 %v1340, 7
      %v1342 = vsub.s32 0, %v1341
      %v1343 = vrot.slane %v1338, %v1342
      %v1344 = vlaneseq
      %v1345 = vshrl.u32 %v1344, 7
      %v1346 = vsub.s32 1, %v1345
      %v1347 = vrot.slane %v1338, %v1346
      %1348 = vrot.lane.b32.xlu0 %v1343, 32
      %v1349 = vpop.permute.xlu0 %1348
      %1350 = vrot.lane.b32.xlu0 %v1347, 32
      %v1351 = vpop.permute.xlu0 %1350
      %v1352 = vsel %vm278, %v1349, %v1351
      %v1356 = vmul.f32 %v986, %v1349
      %v1357 = vmul.f32 %v987, %v1352
      %v1358 = vmul.f32 %v1231, %v1351
      %v1359 = vmul.f32 %v989, %v1349
      %v1360 = vmul.f32 %v990, %v1352
      %v1361 = vmul.f32 %v1232, %v1351
      %v1368 = vrot.slane %v1356, 2
      %v1369 = vrot.slane %v1359, 2
      %v1370 = vsel %vm1022, %v1368, %v1369
      %v1371 = vrot.slane %v1357, 2
      %v1372 = vrot.slane %v1360, 2
      %v1373 = vsel %vm1022, %v1371, %v1372
      %v1374 = vrot.slane %v1358, 2
      %v1375 = vrot.slane %v1361, 2
      %v1376 = vsel %vm1022, %v1374, %v1375
      %1377 = vrot.lane.b32.xlu0 %v1370, 96
      %v1378 = vpop.permute.xlu0 %1377
      %1379 = vrot.lane.b32.xlu0 %v1373, 96
      %v1380 = vpop.permute.xlu0 %1379
      %1381 = vrot.lane.b32.xlu0 %v1376, 96
      %v1382 = vpop.permute.xlu0 %1381
      %v1383 = vsel %vm261, %v1378, %v1380
      %v1384 = vsel %vm261, %v1380, %v1382
      %v1387 = vadd.f32 %v1335, %v1383
      %v1388 = vadd.f32 %v1336, %v1384
      %s1389 = scalar_lea.vmem %s1, 50
      %v1390 = vld [vmem:[%s1389] ss:$8 sm:$0x3]
      %v1392 = vlaneseq
      %v1393 = vshrl.u32 %v1392, 7
      %v1394 = vsub.s32 0, %v1393
      %v1395 = vrot.slane %v1390, %v1394
      %v1396 = vlaneseq
      %v1397 = vshrl.u32 %v1396, 7
      %v1398 = vsub.s32 1, %v1397
      %v1399 = vrot.slane %v1390, %v1398
      %1400 = vrot.lane.b32.xlu0 %v1395, 33
      %v1401 = vpop.permute.xlu0 %1400
      %1402 = vrot.lane.b32.xlu0 %v1399, 33
      %v1403 = vpop.permute.xlu0 %1402
      %v1404 = vsel %vm239, %v1401, %v1403
      %v1408 = vmul.f32 %v986, %v1401
      %v1409 = vmul.f32 %v987, %v1404
      %v1410 = vmul.f32 %v1231, %v1403
      %v1411 = vmul.f32 %v989, %v1401
      %v1412 = vmul.f32 %v990, %v1404
      %v1413 = vmul.f32 %v1232, %v1403
      %v1420 = vrot.slane %v1408, 2
      %v1421 = vrot.slane %v1411, 2
      %v1422 = vsel %vm1022, %v1420, %v1421
      %v1423 = vrot.slane %v1409, 2
      %v1424 = vrot.slane %v1412, 2
      %v1425 = vsel %vm1022, %v1423, %v1424
      %v1426 = vrot.slane %v1410, 2
      %v1427 = vrot.slane %v1413, 2
      %v1428 = vsel %vm1022, %v1426, %v1427
      %1429 = vrot.lane.b32.xlu0 %v1422, 95
      %v1430 = vpop.permute.xlu0 %1429
      %1431 = vrot.lane.b32.xlu0 %v1425, 95
      %v1432 = vpop.permute.xlu0 %1431
      %1433 = vrot.lane.b32.xlu0 %v1428, 95
      %v1434 = vpop.permute.xlu0 %1433
      %v1435 = vsel %vm222, %v1430, %v1432
      %v1436 = vsel %vm222, %v1432, %v1434
      %v1439 = vadd.f32 %v1387, %v1435
      %v1440 = vadd.f32 %v1388, %v1436
      %1441 = vst [vmem:[%s170] sm:$0xff] %v1439
      %1442 = vst [vmem:[%s170 + $0x8] sm:$0xff] %v1440
      %p1443 = scmp.lt.s32.totalorder %s14, 1
      %s1444 = scalar_select %p1443, %s14, 1
      %s1445 = smul.addr %s1444, 2
      %s1446 = smul.addr %s1445, 8
      %s1447 = scalar_lea.vmem %s3, %s1446
      // Predicated region
      $region33: #{dwconv_forward.1} parent=31 // pred_check
        %p1448 = pneg %p100
      $region34: #{dwconv_forward.1} parent=31 // pred_check_branch
        %1450 = sbr.rel (%p1448) target = $region36
      $region35: #{dwconv_forward.1} parent=31 // pred_region
        _
      $region36: #{dwconv_forward.1} parent=31 // pred_fallthru
        _
    $region32: #{dwconv_forward.1} parent=5 // pred_fallthru
      _
    %p1451 = scmp.le.s32.totalorder 2, %s9
    // Predicated region
    $region37: #{dwconv_forward.1} parent=5 // pred_check
      %p1452 = pneg %p1451
    $region38: #{dwconv_forward.1} parent=5 // pred_check_branch
      %1454 = sbr.rel (%p1452) target = $region40
    $region39: #{dwconv_forward.1} parent=5 // pred_region
      %s1455 = ssub.s32 %s9, 2
      // Predicated region
      $region41: #{dwconv_forward.1} parent=39 // pred_check
        %p1456 = pneg %p106
      $region42: #{dwconv_forward.1} parent=39 // pred_check_branch
        %1458 = sbr.rel (%p1456) target = $region44
      $region43: #{dwconv_forward.1} parent=39 // pred_region
        %p1459 = scmp.lt.s32.totalorder %s15, 1
        %s1460 = scalar_select %p1459, %s15, 1
        %s1461 = smul.addr %s1460, 2
        %s1462 = smul.addr %s1461, 8
        %s1463 = scalar_lea.vmem %s3, %s1462
      $region44: #{dwconv_forward.1} parent=39 // pred_fallthru
        _
    $region40: #{dwconv_forward.1} parent=5 // pred_fallthru
      _
  $region6: #{dwconv_forward.1} parent=0 // loop_footer
    %s13 = sadd.s32 1, %s9
  $region7: #{dwconv_forward.1} parent=0 // loop_footer_branch
    %8 = sbr.rel target = $region3
  $region8: #{dwconv_forward.1} parent=0 // loop_exit
    _

</llo_original>
